<compile_context>
chip_gen: v7x
topology: tpu7x:2x2x1
jax: 0.10.0
libtpu: 0.0.40
codegen_flags: <defaults>
</compile_context>

<pallas_src>
from functools import partial

import jax
import jax.numpy as jnp
from jax.experimental import pallas as pl
from jax.experimental.pallas import tpu as pltpu

CLAMP = 2.0  # soft-clamp magnitude for the coupling log-scale


def ib_inn_kernel(x_ref, w1_ref, b1_ref, w2_ref, b2_ref, mu_t_ref, nhmusq_ref,
                  z_ref, out_ref, za_sc, zb_sc, logj_sc):
    """One coupling block per grid step on axis 1; carry state in VMEM scratch."""
    i = pl.program_id(1)
    nb = pl.num_programs(1)
    half = za_sc.shape[1]

    # ---- init carry from the input tile at the first coupling block --------
    @pl.when(i == 0)
    def _():
        x = x_ref[...]                       # [BT, D] f32
        za_sc[...] = x[:, :half]             # conditioning half
        zb_sc[...] = x[:, half:]             # transformed half
        logj_sc[...] = jnp.zeros_like(logj_sc)

    za = za_sc[...]
    zb = zb_sc[...]

    w1 = w1_ref[0]                           # [half, hidden] bf16 (streamed)
    b1 = b1_ref[0]                           # [1, hidden]    f32  (streamed)
    w2 = w2_ref[0]                           # [hidden, D]    bf16 (streamed)
    b2 = b2_ref[0]                           # [1, D]         f32  (streamed)

    # subnet: Linear -> ReLU -> Linear (bf16 MXU matmuls, f32 accumulation).
    h = jnp.dot(za.astype(jnp.bfloat16), w1,
                preferred_element_type=jnp.float32) + b1
    h = jnp.maximum(h, 0.0)
    st = jnp.dot(h.astype(jnp.bfloat16), w2,
                 preferred_element_type=jnp.float32) + b2

    # soft-clamped log-scale + shift (GLOW-style affine coupling), f32 on EUP.
    # TODO(synk): FrEIA/IB-INN uses an atan-based clamp; tanh clamp kept here
    # (matches the pure-JAX reference; resolve before benchmarking vs PyTorch).
    s = CLAMP * jnp.tanh(st[:, :half] * (1.0 / CLAMP))
    t = st[:, half:]

    zb_new = zb * jnp.exp(s) + t
    logj_sc[...] = logj_sc[...] + jnp.sum(s, axis=-1, keepdims=True)

    # hard permutation between blocks: swap halves.  Pure renaming via the two
    # scratch buffers — no concatenate, no extra copy.
    za_sc[...] = zb_new
    zb_sc[...] = za

    # ---- finalize: write z, GMM readout packed together with log|det J| ----
    @pl.when(i == nb - 1)
    def _():
        za_f = za_sc[...]
        zb_f = zb_sc[...]
        z_ref[:, :half] = za_f               # lane-aligned half-width stores
        z_ref[:, half:] = zb_f

        # logits_k = -0.5||z - mu_k||^2 = z.mu_k - 0.5||z||^2 - 0.5||mu_k||^2
        zz = (jnp.sum(za_f * za_f, axis=-1, keepdims=True)
              + jnp.sum(zb_f * zb_f, axis=-1, keepdims=True))        # [BT, 1]
        mu_a = mu_t_ref[:half, :]                                    # [half, Kp] bf16
        mu_b = mu_t_ref[half:, :]
        zmu = (jnp.dot(za_f.astype(jnp.bfloat16), mu_a,
                       preferred_element_type=jnp.float32)
               + jnp.dot(zb_f.astype(jnp.bfloat16), mu_b,
                         preferred_element_type=jnp.float32))        # [BT, Kp]
        logits = zmu - 0.5 * zz + nhmusq_ref[...]
        # Pack log|det J| into the last (padded) class lane: one lane-dense
        # output, no 1-lane-wide second output stream.
        kp = logits.shape[1]
        lane = jax.lax.broadcasted_iota(jnp.int32, logits.shape, 1)
        out_ref[...] = jnp.where(lane == kp - 1, logj_sc[...], logits)


def _round_up(n, m):
    return ((n + m - 1) // m) * m


def _vmem_bytes(batch_tile, D, half, hidden, Kp):
    """Working-set estimate (bytes) for the pipelined kernel."""
    f32, bf16 = 4, 2
    b = 0
    b += 2 * batch_tile * D * f32            # x tile (double-buffered)
    b += 2 * batch_tile * D * f32            # z output tile
    b += 2 * batch_tile * Kp * f32           # packed logits/logj output tile
    b += 2 * half * hidden * bf16            # streamed w1 block
    b += 2 * hidden * D * bf16               # streamed w2 block
    b += 2 * 8 * hidden * f32                # streamed b1 (sublane-padded)
    b += 2 * 8 * D * f32                     # streamed b2 (sublane-padded)
    b += 2 * D * Kp * bf16                   # mu^T (resident, default-buffered)
    b += 2 * 8 * Kp * f32                    # -0.5||mu||^2
    b += batch_tile * (D + 128) * f32        # za/zb/logj VMEM scratch
    b += 4 * batch_tile * D * f32            # activation temporaries headroom
    return b


@partial(jax.jit, static_argnames=("batch_tile",))
def ib_inn_forward(x, params, batch_tile=None):
    """x: [B, C, H, W] f32. Returns (z [B,D], log|det J| [B,1], logits [B,K])."""
    w1, b1, w2, b2, mu = params
    B = x.shape[0]
    D = int(x.shape[1] * x.shape[2] * x.shape[3])
    nb, half, hidden = w1.shape
    K = mu.shape[0]
    assert 2 * half == D and w2.shape == (nb, hidden, D)

    # --- batch padding / tiling: bf16 LHS packs 16 rows per sublane group, so
    #     round to multiples of 16; tiles up to 256 rows amortize per-step cost.
    if batch_tile is None:
        batch_tile = min(256, _round_up(B, 16))
    Bp = _round_up(max(B, batch_tile), batch_tile)
    n_tiles = Bp // batch_tile
    # v7x megacore: prefer >= 2 batch tiles so both TensorCores get work.
    if n_tiles == 1 and batch_tile >= 32:
        batch_tile = _round_up(batch_tile // 2, 16)
        Bp = _round_up(max(B, batch_tile), batch_tile)
        n_tiles = Bp // batch_tile

    x_flat = x.reshape(B, D).astype(jnp.float32)
    x_pad = jnp.pad(x_flat, ((0, Bp - B), (0, 0)))   # fresh buffer -> aliasing safe

    # --- lane-dense classes; keep >= 1 spare lane to carry log|det J| --------
    Kp = _round_up(K + 1, 128)
    mu_f32 = mu.astype(jnp.float32)
    mu_pad = jnp.pad(mu_f32, ((0, Kp - K), (0, 0)))                  # [Kp, D]
    mu_t = jnp.transpose(mu_pad).astype(jnp.bfloat16)                # [D, Kp]
    neg_half_musq = jnp.pad(-0.5 * jnp.sum(mu_f32 * mu_f32, axis=-1),
                            (0, Kp - K))[None, :]                    # [1, Kp] f32

    # bf16 weights: MXU-native, half the streamed DMA bytes; biases stay f32.
    w1b = w1.astype(jnp.bfloat16)
    w2b = w2.astype(jnp.bfloat16)
    b1f = b1.astype(jnp.float32)
    b2f = b2.astype(jnp.float32)

    out_shapes = (
        jax.ShapeDtypeStruct((Bp, D), jnp.float32),      # z
        jax.ShapeDtypeStruct((Bp, Kp), jnp.float32),     # logits (+ logj lane)
    )

    grid_spec = pltpu.PrefetchScalarGridSpec(
        num_scalar_prefetch=0,
        grid=(n_tiles, nb),                              # (batch tiles, blocks)
        in_specs=[
            pl.BlockSpec((batch_tile, D), lambda b, i: (b, 0)),       # x tile
            pl.BlockSpec((1, half, hidden), lambda b, i: (i, 0, 0)),  # W1 stream
            pl.BlockSpec((1, 1, hidden), lambda b, i: (i, 0, 0)),     # b1 stream
            pl.BlockSpec((1, hidden, D), lambda b, i: (i, 0, 0)),     # W2 stream
            pl.BlockSpec((1, 1, D), lambda b, i: (i, 0, 0)),          # b2 stream
            pl.BlockSpec((D, Kp), lambda b, i: (0, 0)),               # mu^T
            pl.BlockSpec((1, Kp), lambda b, i: (0, 0)),               # -0.5||mu||^2
        ],
        out_specs=[
            pl.BlockSpec((batch_tile, D), lambda b, i: (b, 0)),
            pl.BlockSpec((batch_tile, Kp), lambda b, i: (b, 0)),
        ],
        scratch_shapes=[
            pltpu.VMEM((batch_tile, half), jnp.float32),   # za carry
            pltpu.VMEM((batch_tile, half), jnp.float32),   # zb carry
            pltpu.VMEM((batch_tile, 1), jnp.float32),      # log|det J| carry
        ],
    )

    # Explicit scoped-VMEM budget (working set + headroom), capped at v7x's
    # 64 MiB physical VMEM; raise the cap on v6e if larger tiles are desired.
    vmem_limit = min(2 * _vmem_bytes(batch_tile, D, half, hidden, Kp) + (8 << 20),
                     64 << 20)

    flops = 2 * Bp * nb * (half * hidden + hidden * D) + 2 * Bp * D * Kp
    transcendentals = 2 * Bp * nb * half
    bytes_accessed = (2 * Bp * D * 4 + Bp * Kp * 4
                      + n_tiles * nb * ((half * hidden + hidden * D) * 2
                                        + (hidden + D) * 4)
                      + D * Kp * 2)

    z, packed = pl.pallas_call(
        ib_inn_kernel,
        out_shape=out_shapes,
        grid_spec=grid_spec,
        # x is consumed once and has the same shape/dtype as z: alias them so
        # no second resident [Bp, D] HBM buffer / extra DMA is required.
        # (Safe because x_pad is always a fresh padded intermediate.)
        input_output_aliases={0: 0},
        compiler_params=pltpu.CompilerParams(
            # batch tiles independent -> megacore split; block axis is a carry.
            dimension_semantics=("parallel", "arbitrary"),
            vmem_limit_bytes=int(vmem_limit)),
        cost_estimate=pl.CostEstimate(flops=int(flops),
                                      transcendentals=int(transcendentals),
                                      bytes_accessed=int(bytes_accessed)),
    )(x_pad, w1b, b1f, w2b, b2f, mu_t, neg_half_musq)

    logits = packed[:B, :K]
    logj = packed[:B, Kp - 1:Kp]
    return z[:B], logj, logits


def ib_inn_reference(x, params):
    """Pure-JAX reference with identical (bf16-matmul) semantics."""
    w1, b1, w2, b2, mu = params
    B = x.shape[0]
    z = x.reshape(B, -1).astype(jnp.float32)
    D = z.shape[1]
    half = D // 2
    logj = jnp.zeros((B, 1), jnp.float32)
    for i in range(w1.shape[0]):
        z1, z2 = z[:, :half], z[:, half:]
        h = jnp.dot(z1.astype(jnp.bfloat16), w1[i].astype(jnp.bfloat16),
                    preferred_element_type=jnp.float32) + b1[i]
        h = jnp.maximum(h, 0.0)
        st = jnp.dot(h.astype(jnp.bfloat16), w2[i].astype(jnp.bfloat16),
                     preferred_element_type=jnp.float32) + b2[i]
        s = CLAMP * jnp.tanh(st[:, :half] / CLAMP)
        t = st[:, half:]
        z2n = z2 * jnp.exp(s) + t
        logj = logj + jnp.sum(s, axis=-1, keepdims=True)
        z = jnp.concatenate([z2n, z1], axis=-1)
    zz = jnp.sum(z * z, axis=-1, keepdims=True)
    zmu = jnp.dot(z.astype(jnp.bfloat16), mu.T.astype(jnp.bfloat16),
                  preferred_element_type=jnp.float32)
    logits = -0.5 * (zz - 2.0 * zmu + jnp.sum(mu * mu, axis=-1)[None, :])
    return z, logj, logits


def init_params(key, D, hidden, nb, K):
    half = D // 2
    ks = jax.random.split(key, 5)
    w1 = 0.05 * jax.random.normal(ks[0], (nb, half, hidden), jnp.float32)
    b1 = 0.05 * jax.random.normal(ks[1], (nb, 1, hidden), jnp.float32)
    w2 = 0.05 * jax.random.normal(ks[2], (nb, hidden, D), jnp.float32)
    b2 = 0.05 * jax.random.normal(ks[3], (nb, 1, D), jnp.float32)
    mu = jax.random.normal(ks[4], (K, D), jnp.float32)
    return w1, b1, w2, b2, mu


if __name__ == "__main__":
    # Small shapes: B=2, C=4, H=W=16 -> D=1024 (half=512, lane-aligned),
    # hidden=128 (MXU/lane aligned; use a multiple of 256 on v6e/v7x for full
    # MXU contraction width), 4 coupling blocks, 10 classes (padded to 128
    # lanes inside the wrapper).  Batch is padded to 16 rows internally.
    B, C, H, W = 2, 4, 16, 16
    D = C * H * W
    HIDDEN, NB, K = 128, 4, 10

    key = jax.random.PRNGKey(0)
    kx, kp = jax.random.split(key)
    x = jax.random.normal(kx, (B, C, H, W), jnp.float32)   # NCHW input
    params = init_params(kp, D, HIDDEN, NB, K)

    z, logj, logits = jax.block_until_ready(ib_inn_forward(x, params))
    z_r, logj_r, logits_r = ib_inn_reference(x, params)

    # bf16 matmuls in both paths -> compare with bf16-appropriate tolerances.
    assert jnp.allclose(z, z_r, rtol=3e-2, atol=3e-2), "z mismatch"
    assert jnp.allclose(logj, logj_r, rtol=3e-2, atol=5e-1), "logj mismatch"
    assert jnp.allclose(logits, logits_r, rtol=3e-2, atol=3.0), "logits mismatch"

    print("KERNEL_OK")
</pallas_src>

<mosaic_0001>
module attributes {stable_mosaic.version = 11 : i64} {
  func.func @ib_inn_kernel(%arg0: i32, %arg1: i32, %arg2: memref<16x1024xf32, #tpu.memory_space<vmem>>, %arg3: memref<1x512x128xbf16, #tpu.memory_space<vmem>>, %arg4: memref<1x1x128xf32, #tpu.memory_space<vmem>>, %arg5: memref<1x128x1024xbf16, #tpu.memory_space<vmem>>, %arg6: memref<1x1x1024xf32, #tpu.memory_space<vmem>>, %arg7: memref<1024x128xbf16, #tpu.memory_space<vmem>>, %arg8: memref<1x128xf32, #tpu.memory_space<vmem>>, %arg9: memref<16x1024xf32, #tpu.memory_space<vmem>>, %arg10: memref<16x128xf32, #tpu.memory_space<vmem>>, %arg11: memref<16x512xf32, #tpu.memory_space<vmem>>, %arg12: memref<16x512xf32, #tpu.memory_space<vmem>>, %arg13: memref<16x1xf32, #tpu.memory_space<vmem>>) attributes {dimension_semantics = [#tpu.dimension_semantics<parallel>, #tpu.dimension_semantics<arbitrary>], iteration_bounds = array<i64: 1, 4>, scalar_prefetch = 0 : i64, scratch_operands = 3 : i64, tpu.core_type = #tpu.core_type<tc>, window_params = [{transform_indices = @transform_0, window_bounds = array<i64: 16, 1024>}, {transform_indices = @transform_1, window_bounds = array<i64: 1, 512, 128>}, {transform_indices = @transform_2, window_bounds = array<i64: 1, 1, 128>}, {transform_indices = @transform_3, window_bounds = array<i64: 1, 128, 1024>}, {transform_indices = @transform_4, window_bounds = array<i64: 1, 1, 1024>}, {pipeline_mode = #tpu.pipeline_mode<synchronous>, transform_indices = @transform_5, window_bounds = array<i64: 1024, 128>}, {pipeline_mode = #tpu.pipeline_mode<synchronous>, transform_indices = @transform_6, window_bounds = array<i64: 1, 128>}, {transform_indices = @transform_7, window_bounds = array<i64: 16, 1024>}, {transform_indices = @transform_8, window_bounds = array<i64: 16, 128>}]} {
    %c0_i32 = arith.constant 0 : i32
    %0 = arith.cmpi eq, %arg1, %c0_i32 : i32
    %1 = arith.extui %0 : i1 to i32
    %c0_i32_0 = arith.constant 0 : i32
    %2 = arith.cmpi ne, %1, %c0_i32_0 : i32
    scf.if %2 {
      %c0_30 = arith.constant 0 : index
      %c0_31 = arith.constant 0 : index
      %43 = vector.load %arg2[%c0_30, %c0_31] : memref<16x1024xf32, #tpu.memory_space<vmem>>, vector<16x1024xf32>
      %44 = vector.extract_strided_slice %43 {offsets = [0, 0], sizes = [16, 512], strides = [1, 1]} : vector<16x1024xf32> to vector<16x512xf32>
      %c0_32 = arith.constant 0 : index
      %c0_33 = arith.constant 0 : index
      %45 = vector.load %arg11[%c0_32, %c0_33] : memref<16x512xf32, #tpu.memory_space<vmem>>, vector<16x512xf32>
      tpu.vector_store %arg11[%c0_32, %c0_33], %44 {strides = array<i32>} : memref<16x512xf32, #tpu.memory_space<vmem>>, vector<16x512xf32>,
      %46 = vector.extract_strided_slice %43 {offsets = [0, 512], sizes = [16, 512], strides = [1, 1]} : vector<16x1024xf32> to vector<16x512xf32>
      %c0_34 = arith.constant 0 : index
      %c0_35 = arith.constant 0 : index
      %47 = vector.load %arg12[%c0_34, %c0_35] : memref<16x512xf32, #tpu.memory_space<vmem>>, vector<16x512xf32>
      tpu.vector_store %arg12[%c0_34, %c0_35], %46 {strides = array<i32>} : memref<16x512xf32, #tpu.memory_space<vmem>>, vector<16x512xf32>,
      %cst_36 = arith.constant 0.000000e+00 : f32
      %48 = vector.broadcast %cst_36 : f32 to vector<16x1xf32>
      %c0_37 = arith.constant 0 : index
      %c0_38 = arith.constant 0 : index
      %49 = vector.load %arg13[%c0_37, %c0_38] : memref<16x1xf32, #tpu.memory_space<vmem>>, vector<16x1xf32>
      tpu.vector_store %arg13[%c0_37, %c0_38], %48 {strides = array<i32>} : memref<16x1xf32, #tpu.memory_space<vmem>>, vector<16x1xf32>,
    } else {
    }
    %c0 = arith.constant 0 : index
    %c0_1 = arith.constant 0 : index
    %3 = vector.load %arg11[%c0, %c0_1] : memref<16x512xf32, #tpu.memory_space<vmem>>, vector<16x512xf32>
    %c0_2 = arith.constant 0 : index
    %c0_3 = arith.constant 0 : index
    %4 = vector.load %arg12[%c0_2, %c0_3] : memref<16x512xf32, #tpu.memory_space<vmem>>, vector<16x512xf32>
    %c0_4 = arith.constant 0 : index
    %c0_5 = arith.constant 0 : index
    %c0_6 = arith.constant 0 : index
    %5 = vector.load %arg3[%c0_4, %c0_5, %c0_6] : memref<1x512x128xbf16, #tpu.memory_space<vmem>>, vector<1x512x128xbf16>
    %6 = vector.shape_cast %5 : vector<1x512x128xbf16> to vector<512x128xbf16>
    %c0_7 = arith.constant 0 : index
    %c0_8 = arith.constant 0 : index
    %c0_9 = arith.constant 0 : index
    %7 = vector.load %arg4[%c0_7, %c0_8, %c0_9] : memref<1x1x128xf32, #tpu.memory_space<vmem>>, vector<1x1x128xf32>
    %8 = vector.shape_cast %7 : vector<1x1x128xf32> to vector<1x128xf32>
    %c0_10 = arith.constant 0 : index
    %c0_11 = arith.constant 0 : index
    %c0_12 = arith.constant 0 : index
    %9 = vector.load %arg5[%c0_10, %c0_11, %c0_12] : memref<1x128x1024xbf16, #tpu.memory_space<vmem>>, vector<1x128x1024xbf16>
    %10 = vector.shape_cast %9 : vector<1x128x1024xbf16> to vector<128x1024xbf16>
    %c0_13 = arith.constant 0 : index
    %c0_14 = arith.constant 0 : index
    %c0_15 = arith.constant 0 : index
    %11 = vector.load %arg6[%c0_13, %c0_14, %c0_15] : memref<1x1x1024xf32, #tpu.memory_space<vmem>>, vector<1x1x1024xf32>
    %12 = vector.shape_cast %11 : vector<1x1x1024xf32> to vector<1x1024xf32>
    %13 = arith.truncf %3 : vector<16x512xf32> to vector<16x512xbf16>
    %cst = arith.constant dense<0.000000e+00> : vector<16x128xf32>
    %14 = tpu.matmul %13, %6, %cst {dimension_numbers = #tpu.dot_dimension_numbers<[1], [0], [0], [1], [0, 0, 1, 1], [], []>} : vector<16x512xbf16>, vector<512x128xbf16>, vector<16x128xf32> -> vector<16x128xf32>
    %15 = vector.broadcast %8 : vector<1x128xf32> to vector<16x128xf32>
    %16 = arith.addf %14, %15 : vector<16x128xf32>
    %cst_16 = arith.constant 0.000000e+00 : f32
    %17 = vector.broadcast %cst_16 : f32 to vector<16x128xf32>
    %18 = arith.maximumf %16, %17 : vector<16x128xf32>
    %19 = arith.truncf %18 : vector<16x128xf32> to vector<16x128xbf16>
    %cst_17 = arith.constant dense<0.000000e+00> : vector<16x1024xf32>
    %20 = tpu.matmul %19, %10, %cst_17 {dimension_numbers = #tpu.dot_dimension_numbers<[1], [0], [0], [1], [0, 0, 1, 1], [], []>} : vector<16x128xbf16>, vector<128x1024xbf16>, vector<16x1024xf32> -> vector<16x1024xf32>
    %21 = vector.broadcast %12 : vector<1x1024xf32> to vector<16x1024xf32>
    %22 = arith.addf %20, %21 : vector<16x1024xf32>
    %23 = vector.extract_strided_slice %22 {offsets = [0, 0], sizes = [16, 512], strides = [1, 1]} : vector<16x1024xf32> to vector<16x512xf32>
    %cst_18 = arith.constant 5.000000e-01 : f32
    %24 = vector.broadcast %cst_18 : f32 to vector<16x512xf32>
    %25 = arith.mulf %23, %24 : vector<16x512xf32>
    %26 = math.tanh %25 : vector<16x512xf32>
    %cst_19 = arith.constant 2.000000e+00 : f32
    %27 = vector.broadcast %cst_19 : f32 to vector<16x512xf32>
    %28 = arith.mulf %27, %26 : vector<16x512xf32>
    %29 = vector.extract_strided_slice %22 {offsets = [0, 512], sizes = [16, 512], strides = [1, 1]} : vector<16x1024xf32> to vector<16x512xf32>
    %30 = math.exp %28 : vector<16x512xf32>
    %31 = arith.mulf %4, %30 : vector<16x512xf32>
    %32 = arith.addf %31, %29 : vector<16x512xf32>
    %c0_20 = arith.constant 0 : index
    %c0_21 = arith.constant 0 : index
    %33 = vector.load %arg13[%c0_20, %c0_21] : memref<16x1xf32, #tpu.memory_space<vmem>>, vector<16x1xf32>
    %cst_22 = arith.constant dense<0.000000e+00> : vector<16xf32>
    %34 = vector.multi_reduction <add>, %28, %cst_22 [1] : vector<16x512xf32> to vector<16xf32>
    %35 = vector.shape_cast %34 : vector<16xf32> to vector<16x1xf32>
    %36 = arith.addf %33, %35 : vector<16x1xf32>
    %c0_23 = arith.constant 0 : index
    %c0_24 = arith.constant 0 : index
    %37 = vector.load %arg13[%c0_23, %c0_24] : memref<16x1xf32, #tpu.memory_space<vmem>>, vector<16x1xf32>
    tpu.vector_store %arg13[%c0_23, %c0_24], %36 {strides = array<i32>} : memref<16x1xf32, #tpu.memory_space<vmem>>, vector<16x1xf32>,
    %c0_25 = arith.constant 0 : index
    %c0_26 = arith.constant 0 : index
    %38 = vector.load %arg11[%c0_25, %c0_26] : memref<16x512xf32, #tpu.memory_space<vmem>>, vector<16x512xf32>
    tpu.vector_store %arg11[%c0_25, %c0_26], %32 {strides = array<i32>} : memref<16x512xf32, #tpu.memory_space<vmem>>, vector<16x512xf32>,
    %c0_27 = arith.constant 0 : index
    %c0_28 = arith.constant 0 : index
    %39 = vector.load %arg12[%c0_27, %c0_28] : memref<16x512xf32, #tpu.memory_space<vmem>>, vector<16x512xf32>
    tpu.vector_store %arg12[%c0_27, %c0_28], %3 {strides = array<i32>} : memref<16x512xf32, #tpu.memory_space<vmem>>, vector<16x512xf32>,
    %c3_i32 = arith.constant 3 : i32
    %40 = arith.cmpi eq, %arg1, %c3_i32 : i32
    %41 = arith.extui %40 : i1 to i32
    %c0_i32_29 = arith.constant 0 : i32
    %42 = arith.cmpi ne, %41, %c0_i32_29 : i32
    scf.if %42 {
      %c0_30 = arith.constant 0 : index
      %c0_31 = arith.constant 0 : index
      %43 = vector.load %arg11[%c0_30, %c0_31] : memref<16x512xf32, #tpu.memory_space<vmem>>, vector<16x512xf32>
      %c0_32 = arith.constant 0 : index
      %c0_33 = arith.constant 0 : index
      %44 = vector.load %arg12[%c0_32, %c0_33] : memref<16x512xf32, #tpu.memory_space<vmem>>, vector<16x512xf32>
      %c0_34 = arith.constant 0 : index
      %c0_35 = arith.constant 0 : index
      %45 = vector.load %arg9[%c0_34, %c0_35] : memref<16x1024xf32, #tpu.memory_space<vmem>>, vector<16x512xf32>
      tpu.vector_store %arg9[%c0_34, %c0_35], %43 {strides = array<i32>} : memref<16x1024xf32, #tpu.memory_space<vmem>>, vector<16x512xf32>,
      %c0_36 = arith.constant 0 : index
      %c512 = arith.constant 512 : index
      %46 = vector.load %arg9[%c0_36, %c512] : memref<16x1024xf32, #tpu.memory_space<vmem>>, vector<16x512xf32>
      tpu.vector_store %arg9[%c0_36, %c512], %44 {strides = array<i32>} : memref<16x1024xf32, #tpu.memory_space<vmem>>, vector<16x512xf32>,
      %47 = arith.mulf %43, %43 : vector<16x512xf32>
      %cst_37 = arith.constant dense<0.000000e+00> : vector<16xf32>
      %48 = vector.multi_reduction <add>, %47, %cst_37 [1] : vector<16x512xf32> to vector<16xf32>
      %49 = vector.shape_cast %48 : vector<16xf32> to vector<16x1xf32>
      %50 = arith.mulf %44, %44 : vector<16x512xf32>
      %cst_38 = arith.constant dense<0.000000e+00> : vector<16xf32>
      %51 = vector.multi_reduction <add>, %50, %cst_38 [1] : vector<16x512xf32> to vector<16xf32>
      %52 = vector.shape_cast %51 : vector<16xf32> to vector<16x1xf32>
      %53 = arith.addf %49, %52 : vector<16x1xf32>
      %c0_39 = arith.constant 0 : index
      %c0_40 = arith.constant 0 : index
      %54 = vector.load %arg7[%c0_39, %c0_40] : memref<1024x128xbf16, #tpu.memory_space<vmem>>, vector<512x128xbf16>
      %c512_41 = arith.constant 512 : index
      %c0_42 = arith.constant 0 : index
      %55 = vector.load %arg7[%c512_41, %c0_42] : memref<1024x128xbf16, #tpu.memory_space<vmem>>, vector<512x128xbf16>
      %56 = arith.truncf %43 : vector<16x512xf32> to vector<16x512xbf16>
      %cst_43 = arith.constant dense<0.000000e+00> : vector<16x128xf32>
      %57 = tpu.matmul %56, %54, %cst_43 {dimension_numbers = #tpu.dot_dimension_numbers<[1], [0], [0], [1], [0, 0, 1, 1], [], []>} : vector<16x512xbf16>, vector<512x128xbf16>, vector<16x128xf32> -> vector<16x128xf32>
      %58 = arith.truncf %44 : vector<16x512xf32> to vector<16x512xbf16>
      %cst_44 = arith.constant dense<0.000000e+00> : vector<16x128xf32>
      %59 = tpu.matmul %58, %55, %cst_44 {dimension_numbers = #tpu.dot_dimension_numbers<[1], [0], [0], [1], [0, 0, 1, 1], [], []>} : vector<16x512xbf16>, vector<512x128xbf16>, vector<16x128xf32> -> vector<16x128xf32>
      %60 = arith.addf %57, %59 : vector<16x128xf32>
      %cst_45 = arith.constant 5.000000e-01 : f32
      %61 = vector.broadcast %cst_45 : f32 to vector<16x1xf32>
      %62 = arith.mulf %61, %53 : vector<16x1xf32>
      %63 = vector.broadcast %62 : vector<16x1xf32> to vector<16x128xf32>
      %64 = arith.subf %60, %63 : vector<16x128xf32>
      %c0_46 = arith.constant 0 : index
      %c0_47 = arith.constant 0 : index
      %65 = vector.load %arg8[%c0_46, %c0_47] : memref<1x128xf32, #tpu.memory_space<vmem>>, vector<1x128xf32>
      %66 = vector.broadcast %65 : vector<1x128xf32> to vector<16x128xf32>
      %67 = arith.addf %64, %66 : vector<16x128xf32>
      %68 = tpu.iota {dimensions = array<i32: 1>} : vector<16x128xi32>
      %c127_i32 = arith.constant 127 : i32
      %69 = vector.broadcast %c127_i32 : i32 to vector<16x128xi32>
      %70 = arith.cmpi eq, %68, %69 : vector<16x128xi32>
      %c0_48 = arith.constant 0 : index
      %c0_49 = arith.constant 0 : index
      %71 = vector.load %arg13[%c0_48, %c0_49] : memref<16x1xf32, #tpu.memory_space<vmem>>, vector<16x1xf32>
      %72 = vector.shape_cast %71 : vector<16x1xf32> to vector<16x1xf32>
      %73 = vector.broadcast %72 : vector<16x1xf32> to vector<16x128xf32>
      %74 = arith.select %70, %73, %67 : vector<16x128xi1>, vector<16x128xf32>
      %c0_50 = arith.constant 0 : index
      %c0_51 = arith.constant 0 : index
      %75 = vector.load %arg10[%c0_50, %c0_51] : memref<16x128xf32, #tpu.memory_space<vmem>>, vector<16x128xf32>
      tpu.vector_store %arg10[%c0_50, %c0_51], %74 {strides = array<i32>} : memref<16x128xf32, #tpu.memory_space<vmem>>, vector<16x128xf32>,
    } else {
    }
    return
  }
  func.func @transform_0(%arg0: i32, %arg1: i32) -> (i32, i32) {
    %c0_i32 = arith.constant 0 : i32
    %c0_i32_0 = arith.constant 0 : i32
    return %arg0, %c0_i32 : i32, i32
  }
  func.func @transform_1(%arg0: i32, %arg1: i32) -> (i32, i32, i32) {
    %c0_i32 = arith.constant 0 : i32
    %c0_i32_0 = arith.constant 0 : i32
    %c0_i32_1 = arith.constant 0 : i32
    return %arg1, %c0_i32, %c0_i32_0 : i32, i32, i32
  }
  func.func @transform_2(%arg0: i32, %arg1: i32) -> (i32, i32, i32) {
    %c0_i32 = arith.constant 0 : i32
    %c0_i32_0 = arith.constant 0 : i32
    %c0_i32_1 = arith.constant 0 : i32
    return %arg1, %c0_i32, %c0_i32_0 : i32, i32, i32
  }
  func.func @transform_3(%arg0: i32, %arg1: i32) -> (i32, i32, i32) {
    %c0_i32 = arith.constant 0 : i32
    %c0_i32_0 = arith.constant 0 : i32
    %c0_i32_1 = arith.constant 0 : i32
    return %arg1, %c0_i32, %c0_i32_0 : i32, i32, i32
  }
  func.func @transform_4(%arg0: i32, %arg1: i32) -> (i32, i32, i32) {
    %c0_i32 = arith.constant 0 : i32
    %c0_i32_0 = arith.constant 0 : i32
    %c0_i32_1 = arith.constant 0 : i32
    return %arg1, %c0_i32, %c0_i32_0 : i32, i32, i32
  }
  func.func @transform_5(%arg0: i32, %arg1: i32) -> (i32, i32) {
    %c0_i32 = arith.constant 0 : i32
    %c0_i32_0 = arith.constant 0 : i32
    %c0_i32_1 = arith.constant 0 : i32
    return %c0_i32, %c0_i32_0 : i32, i32
  }
  func.func @transform_6(%arg0: i32, %arg1: i32) -> (i32, i32) {
    %c0_i32 = arith.constant 0 : i32
    %c0_i32_0 = arith.constant 0 : i32
    %c0_i32_1 = arith.constant 0 : i32
    return %c0_i32, %c0_i32_0 : i32, i32
  }
  func.func @transform_7(%arg0: i32, %arg1: i32) -> (i32, i32) {
    %c0_i32 = arith.constant 0 : i32
    %c0_i32_0 = arith.constant 0 : i32
    return %arg0, %c0_i32 : i32, i32
  }
  func.func @transform_8(%arg0: i32, %arg1: i32) -> (i32, i32) {
    %c0_i32 = arith.constant 0 : i32
    %c0_i32_0 = arith.constant 0 : i32
    return %arg0, %c0_i32 : i32, i32
  }
}

</mosaic_0001>

<llo_original>
// kernel: ib_inn_forward.1
$region0: #{ib_inn_forward.1}
  #allocation0 [shape = 'u32[]', space=smem, size = 0x4, offset = 0x4, fixed_abs, tag = 'smem constant byte address 0x4 - core index']
  #allocation1 [shape = 'u32[144,128]{1,0:T(1,128)}', space=vmem, size = 0x12000, scoped, tag = 'internal scratch']
  #allocation2 [shape = 'f32[16,512]{1,0:T(8,128)}', space=vmem, size = 0x8000, scoped, tag = 'scratch operand']
  #allocation3 [shape = 'f32[16,512]{1,0:T(8,128)}', space=vmem, size = 0x8000, scoped, tag = 'scratch operand']
  #allocation4 [shape = 'f32[16,1]{1,0:T(8,128)}', space=vmem, size = 0x2000, scoped, tag = 'scratch operand']
  %s0 = inlined_call_operand.vmem [shape: f32[16,1024], index: 0, kind: input, shape index: {}, may-alias: {0,7}]
  %s1 = inlined_call_operand.vmem [shape: bf16[4,512,128], index: 1, kind: input, shape index: {}]
  %s2 = inlined_call_operand.vmem [shape: f32[4,1,128], index: 2, kind: input, shape index: {}]
  %s3 = inlined_call_operand.vmem [shape: bf16[4,128,1024], index: 3, kind: input, shape index: {}]
  %s4 = inlined_call_operand.vmem [shape: f32[4,1,1024], index: 4, kind: input, shape index: {}]
  %s5 = inlined_call_operand.vmem [shape: bf16[1024,128], index: 5, kind: input, shape index: {}]
  %s6 = inlined_call_operand.vmem [shape: f32[1,128], index: 6, kind: input, shape index: {}]
  %s7 = inlined_call_operand.vmem [shape: f32[16,1024], index: 7, kind: output, shape index: {0}, may-alias: {0,7}]
  %s8 = inlined_call_operand.vmem [shape: f32[16,128], index: 8, kind: output, shape index: {1}]
  %9 = xla_tuple %s7, %s8
  %s10 = sld [smem:[#allocation0]]
  $region77: #{ib_inn_forward.1} parent=0
    _
  %s12 = ssub.s32 1, %s10
  %s13 = scalar_select 0, %s12, %s10
  loop: start=0, step=1, limit=6
  $region2: #{ib_inn_forward.1} parent=0 // loop_pre_header
    _
  $region3: #{ib_inn_forward.1} parent=0 // loop_header
    %s15 = sphi 0, %s19
    %p16 = scmp.ge.s32.totalorder %s15, 6
    %s22 = sphi 0, %s34
    %s23 = sphi 0, %s30
    %s24 = sphi 0, %s22
    %s25 = sphi 0, %s23
    %s26 = sphi 0, %s24
    %s27 = sphi 0, %s25
    %s37 = sphi 0, %s39
    %s40 = sphi 0, %s37
    %s41 = sphi 0, %s40
    %s57 = sphi 0, %s41
    %s63 = sphi 0, %s65
    %s66 = sphi 0, %s63
    %s67 = sphi 0, %s66
    %s83 = sphi 0, %s67
    %s89 = sphi 0, %s91
    %s92 = sphi 0, %s89
    %s93 = sphi 0, %s92
    %s109 = sphi 0, %s93
    %s115 = sphi 0, %s117
    %s118 = sphi 0, %s115
    %s119 = sphi 0, %s118
    %s135 = sphi 0, %s119
    %s141 = sphi 0, %s143
    %s144 = sphi 0, %s141
    %s145 = sphi 0, %s144
    %s161 = sphi 0, %s145
    %s165 = sphi 0, %s165
    %s167 = sphi 0, %s165
    %s168 = sphi 0, %s167
    %s182 = sphi 0, %s168
    %s186 = sphi 0, %s186
    %s188 = sphi 0, %s186
    %s189 = sphi 0, %s188
    %s203 = sphi 0, %s189
    %s209 = sphi 0, %s211
    %s212 = sphi 0, %s209
    %s213 = sphi 0, %s212
    %s229 = sphi 0, %s213
    %s235 = sphi 0, %s237
    %s238 = sphi 0, %s235
    %s239 = sphi 0, %s238
    %s255 = sphi 0, %s239
  $region4: #{ib_inn_forward.1} parent=0 // loop_header_branch
    %18 = sbr.rel (%p16) target = $region8
  $region5: #{ib_inn_forward.1} parent=0 // loop_body
    %s20 = ssub.s32 %s15, 1
    %s21 = ssub.s32 %s15, 2
    %s28 = sadd.s32 1, %s23
    %p29 = scmp.ge.s32.totalorder %s28, 4
    %s30 = scalar_select %p29, 0, %s28
    %s31 = sadd.s32 1, %s22
    %s32 = scalar_select %p29, %s31, %s22
    %p33 = scmp.ge.s32.totalorder %s32, 1
    %s34 = scalar_select %p33, 0, %s32
    %s35 = ssub.s32 %s22, %s34
    %p36 = scmp.eq.s32.totalorder %s35, 0
    %s38 = sadd.s32 %s37, 1
    %s39 = scalar_select %p36, %s37, %s38
    %p42 = pneg %p36
    %p43 = scmp.eq.s32.totalorder %s15, 3
    %p44 = por %p42, %p43
    %p45 = scmp.ne.s32.totalorder %s37, %s40
    %p46 = scmp.eq.s32.totalorder %s15, 0
    %p47 = por %p45, %p46
    %p48 = scmp.ne.s32.totalorder %s37, %s40
    %p49 = scmp.eq.s32.totalorder %s20, 3
    %p50 = por %p48, %p49
    %p51 = scmp.ne.s32.totalorder %s40, %s41
    %p52 = scmp.eq.s32.totalorder %s20, 0
    %p53 = por %p51, %p52
    %p54 = scmp.ne.s32.totalorder %s40, %s41
    %p55 = scmp.eq.s32.totalorder %s21, 3
    %p56 = por %p54, %p55
    %p58 = scmp.ne.s32.totalorder %s41, %s57
    %p59 = scmp.eq.s32.totalorder %s21, 0
    %p60 = por %p58, %p59
    %s61 = ssub.s32 %s23, %s30
    %p62 = scmp.eq.s32.totalorder %s61, 0
    %s64 = sadd.s32 %s63, 1
    %s65 = scalar_select %p62, %s63, %s64
    %p68 = pneg %p62
    %p69 = scmp.eq.s32.totalorder %s15, 3
    %p70 = por %p68, %p69
    %p71 = scmp.ne.s32.totalorder %s63, %s66
    %p72 = scmp.eq.s32.totalorder %s15, 0
    %p73 = por %p71, %p72
    %p74 = scmp.ne.s32.totalorder %s63, %s66
    %p75 = scmp.eq.s32.totalorder %s20, 3
    %p76 = por %p74, %p75
    %p77 = scmp.ne.s32.totalorder %s66, %s67
    %p78 = scmp.eq.s32.totalorder %s20, 0
    %p79 = por %p77, %p78
    %p80 = scmp.ne.s32.totalorder %s66, %s67
    %p81 = scmp.eq.s32.totalorder %s21, 3
    %p82 = por %p80, %p81
    %p84 = scmp.ne.s32.totalorder %s67, %s83
    %p85 = scmp.eq.s32.totalorder %s21, 0
    %p86 = por %p84, %p85
    %s87 = ssub.s32 %s23, %s30
    %p88 = scmp.eq.s32.totalorder %s87, 0
    %s90 = sadd.s32 %s89, 1
    %s91 = scalar_select %p88, %s89, %s90
    %p94 = pneg %p88
    %p95 = scmp.eq.s32.totalorder %s15, 3
    %p96 = por %p94, %p95
    %p97 = scmp.ne.s32.totalorder %s89, %s92
    %p98 = scmp.eq.s32.totalorder %s15, 0
    %p99 = por %p97, %p98
    %p100 = scmp.ne.s32.totalorder %s89, %s92
    %p101 = scmp.eq.s32.totalorder %s20, 3
    %p102 = por %p100, %p101
    %p103 = scmp.ne.s32.totalorder %s92, %s93
    %p104 = scmp.eq.s32.totalorder %s20, 0
    %p105 = por %p103, %p104
    %p106 = scmp.ne.s32.totalorder %s92, %s93
    %p107 = scmp.eq.s32.totalorder %s21, 3
    %p108 = por %p106, %p107
    %p110 = scmp.ne.s32.totalorder %s93, %s109
    %p111 = scmp.eq.s32.totalorder %s21, 0
    %p112 = por %p110, %p111
    %s113 = ssub.s32 %s23, %s30
    %p114 = scmp.eq.s32.totalorder %s113, 0
    %s116 = sadd.s32 %s115, 1
    %s117 = scalar_select %p114, %s115, %s116
    %p120 = pneg %p114
    %p121 = scmp.eq.s32.totalorder %s15, 3
    %p122 = por %p120, %p121
    %p123 = scmp.ne.s32.totalorder %s115, %s118
    %p124 = scmp.eq.s32.totalorder %s15, 0
    %p125 = por %p123, %p124
    %p126 = scmp.ne.s32.totalorder %s115, %s118
    %p127 = scmp.eq.s32.totalorder %s20, 3
    %p128 = por %p126, %p127
    %p129 = scmp.ne.s32.totalorder %s118, %s119
    %p130 = scmp.eq.s32.totalorder %s20, 0
    %p131 = por %p129, %p130
    %p132 = scmp.ne.s32.totalorder %s118, %s119
    %p133 = scmp.eq.s32.totalorder %s21, 3
    %p134 = por %p132, %p133
    %p136 = scmp.ne.s32.totalorder %s119, %s135
    %p137 = scmp.eq.s32.totalorder %s21, 0
    %p138 = por %p136, %p137
    %s139 = ssub.s32 %s23, %s30
    %p140 = scmp.eq.s32.totalorder %s139, 0
    %s142 = sadd.s32 %s141, 1
    %s143 = scalar_select %p140, %s141, %s142
    %p146 = pneg %p140
    %p147 = scmp.eq.s32.totalorder %s15, 3
    %p148 = por %p146, %p147
    %p149 = scmp.ne.s32.totalorder %s141, %s144
    %p150 = scmp.eq.s32.totalorder %s15, 0
    %p151 = por %p149, %p150
    %p152 = scmp.ne.s32.totalorder %s141, %s144
    %p153 = scmp.eq.s32.totalorder %s20, 3
    %p154 = por %p152, %p153
    %p155 = scmp.ne.s32.totalorder %s144, %s145
    %p156 = scmp.eq.s32.totalorder %s20, 0
    %p157 = por %p155, %p156
    %p158 = scmp.ne.s32.totalorder %s144, %s145
    %p159 = scmp.eq.s32.totalorder %s21, 3
    %p160 = por %p158, %p159
    %p162 = scmp.ne.s32.totalorder %s145, %s161
    %p163 = scmp.eq.s32.totalorder %s21, 0
    %p164 = por %p162, %p163
    %s166 = sadd.s32 %s165, 1
    %p169 = scmp.eq.s32.totalorder %s15, 3
    %p170 = scmp.ne.s32.totalorder %s165, %s167
    %p171 = scmp.eq.s32.totalorder %s15, 0
    %p172 = por %p170, %p171
    %p173 = scmp.ne.s32.totalorder %s165, %s167
    %p174 = scmp.eq.s32.totalorder %s20, 3
    %p175 = por %p173, %p174
    %p176 = scmp.ne.s32.totalorder %s167, %s168
    %p177 = scmp.eq.s32.totalorder %s20, 0
    %p178 = por %p176, %p177
    %p179 = scmp.ne.s32.totalorder %s167, %s168
    %p180 = scmp.eq.s32.totalorder %s21, 3
    %p181 = por %p179, %p180
    %p183 = scmp.ne.s32.totalorder %s168, %s182
    %p184 = scmp.eq.s32.totalorder %s21, 0
    %p185 = por %p183, %p184
    %s187 = sadd.s32 %s186, 1
    %p190 = scmp.eq.s32.totalorder %s15, 3
    %p191 = scmp.ne.s32.totalorder %s186, %s188
    %p192 = scmp.eq.s32.totalorder %s15, 0
    %p193 = por %p191, %p192
    %p194 = scmp.ne.s32.totalorder %s186, %s188
    %p195 = scmp.eq.s32.totalorder %s20, 3
    %p196 = por %p194, %p195
    %p197 = scmp.ne.s32.totalorder %s188, %s189
    %p198 = scmp.eq.s32.totalorder %s20, 0
    %p199 = por %p197, %p198
    %p200 = scmp.ne.s32.totalorder %s188, %s189
    %p201 = scmp.eq.s32.totalorder %s21, 3
    %p202 = por %p200, %p201
    %p204 = scmp.ne.s32.totalorder %s189, %s203
    %p205 = scmp.eq.s32.totalorder %s21, 0
    %p206 = por %p204, %p205
    %s207 = ssub.s32 %s22, %s34
    %p208 = scmp.eq.s32.totalorder %s207, 0
    %s210 = sadd.s32 %s209, 1
    %s211 = scalar_select %p208, %s209, %s210
    %p214 = pneg %p208
    %p215 = scmp.eq.s32.totalorder %s15, 3
    %p216 = por %p214, %p215
    %p217 = scmp.ne.s32.totalorder %s209, %s212
    %p218 = scmp.eq.s32.totalorder %s15, 0
    %p219 = por %p217, %p218
    %p220 = scmp.ne.s32.totalorder %s209, %s212
    %p221 = scmp.eq.s32.totalorder %s20, 3
    %p222 = por %p220, %p221
    %p223 = scmp.ne.s32.totalorder %s212, %s213
    %p224 = scmp.eq.s32.totalorder %s20, 0
    %p225 = por %p223, %p224
    %p226 = scmp.ne.s32.totalorder %s212, %s213
    %p227 = scmp.eq.s32.totalorder %s21, 3
    %p228 = por %p226, %p227
    %p230 = scmp.ne.s32.totalorder %s213, %s229
    %p231 = scmp.eq.s32.totalorder %s21, 0
    %p232 = por %p230, %p231
    %s233 = ssub.s32 %s22, %s34
    %p234 = scmp.eq.s32.totalorder %s233, 0
    %s236 = sadd.s32 %s235, 1
    %s237 = scalar_select %p234, %s235, %s236
    %p240 = pneg %p234
    %p241 = scmp.eq.s32.totalorder %s15, 3
    %p242 = por %p240, %p241
    %p243 = scmp.ne.s32.totalorder %s235, %s238
    %p244 = scmp.eq.s32.totalorder %s15, 0
    %p245 = por %p243, %p244
    %p246 = scmp.ne.s32.totalorder %s235, %s238
    %p247 = scmp.eq.s32.totalorder %s20, 3
    %p248 = por %p246, %p247
    %p249 = scmp.ne.s32.totalorder %s238, %s239
    %p250 = scmp.eq.s32.totalorder %s20, 0
    %p251 = por %p249, %p250
    %p252 = scmp.ne.s32.totalorder %s238, %s239
    %p253 = scmp.eq.s32.totalorder %s21, 3
    %p254 = por %p252, %p253
    %p256 = scmp.ne.s32.totalorder %s239, %s255
    %p257 = scmp.eq.s32.totalorder %s21, 0
    %p258 = por %p256, %p257
    %p259 = scmp.le.s32.totalorder 1, %s15
    %p260 = scmp.lt.s32.totalorder %s15, 5
    %p261 = pnand %p259, %p260
    %p262 = pneg %p261
    // Predicated region
    $region9: #{ib_inn_forward.1} parent=5 // pred_check
      _
    $region10: #{ib_inn_forward.1} parent=5 // pred_check_branch
      %264 = sbr.rel (%p261) target = $region12
    $region11: #{ib_inn_forward.1} parent=5 // pred_region
      %s265 = ssub.s32 %s15, 1
      // Predicated region
      $region13: #{ib_inn_forward.1} parent=11 // pred_check
        %p266 = pneg %p53
      $region14: #{ib_inn_forward.1} parent=11 // pred_check_branch
        %268 = sbr.rel (%p266) target = $region16
      $region15: #{ib_inn_forward.1} parent=11 // pred_region
        %s269 = smul.u32 2, %s24
        %p270 = scmp.lt.s32.totalorder %s269, 1
        %s271 = scalar_select %p270, %s269, 1
        %s272 = smul.addr %s271, 8
        %s273 = smul.addr %s272, 8
        %s274 = scalar_lea.vmem %s0, %s273
        %s275 = smul.u32 2, %s24
      $region16: #{ib_inn_forward.1} parent=11 // pred_fallthru
        _
      // Predicated region
      $region17: #{ib_inn_forward.1} parent=11 // pred_check
        %p276 = pneg %p178
      $region18: #{ib_inn_forward.1} parent=11 // pred_check_branch
        %278 = sbr.rel (%p276) target = $region20
      $region19: #{ib_inn_forward.1} parent=11 // pred_region
        _
      $region20: #{ib_inn_forward.1} parent=11 // pred_fallthru
        _
      // Predicated region
      $region21: #{ib_inn_forward.1} parent=11 // pred_check
        %p279 = pneg %p199
      $region22: #{ib_inn_forward.1} parent=11 // pred_check_branch
        %281 = sbr.rel (%p279) target = $region24
      $region23: #{ib_inn_forward.1} parent=11 // pred_region
        _
      $region24: #{ib_inn_forward.1} parent=11 // pred_fallthru
        _
    $region12: #{ib_inn_forward.1} parent=5 // pred_fallthru
      _
    %p282 = scmp.lt.s32.totalorder %s15, 4
    // Predicated region
    $region25: #{ib_inn_forward.1} parent=5 // pred_check
      %p283 = pneg %p282
    $region26: #{ib_inn_forward.1} parent=5 // pred_check_branch
      %285 = sbr.rel (%p283) target = $region28
    $region27: #{ib_inn_forward.1} parent=5 // pred_region
      // Predicated region
      $region29: #{ib_inn_forward.1} parent=27 // pred_check
        %p286 = pneg %p73
      $region30: #{ib_inn_forward.1} parent=27 // pred_check_branch
        %288 = sbr.rel (%p286) target = $region32
      $region31: #{ib_inn_forward.1} parent=27 // pred_region
        %p289 = scmp.lt.s32.totalorder %s23, 3
        %s290 = scalar_select %p289, %s23, 3
        %s291 = smul.addr %s290, 64
        %s292 = smul.addr %s291, 4
        %s293 = scalar_lea.vmem %s1, %s292
      $region32: #{ib_inn_forward.1} parent=27 // pred_fallthru
        _
      // Predicated region
      $region33: #{ib_inn_forward.1} parent=27 // pred_check
        %p294 = pneg %p99
      $region34: #{ib_inn_forward.1} parent=27 // pred_check_branch
        %296 = sbr.rel (%p294) target = $region36
      $region35: #{ib_inn_forward.1} parent=27 // pred_region
        %p297 = scmp.lt.s32.totalorder %s23, 3
        %s298 = scalar_select %p297, %s23, 3
        %s299 = scalar_lea.vmem %s2, %s298
      $region36: #{ib_inn_forward.1} parent=27 // pred_fallthru
        _
      // Predicated region
      $region37: #{ib_inn_forward.1} parent=27 // pred_check
        %p300 = pneg %p125
      $region38: #{ib_inn_forward.1} parent=27 // pred_check_branch
        %302 = sbr.rel (%p300) target = $region40
      $region39: #{ib_inn_forward.1} parent=27 // pred_region
        %p303 = scmp.lt.s32.totalorder %s23, 3
        %s304 = scalar_select %p303, %s23, 3
        %s305 = smul.addr %s304, 128
        %s306 = smul.addr %s305, 4
        %s307 = scalar_lea.vmem %s3, %s306
      $region40: #{ib_inn_forward.1} parent=27 // pred_fallthru
        _
      // Predicated region
      $region41: #{ib_inn_forward.1} parent=27 // pred_check
        %p308 = pneg %p151
      $region42: #{ib_inn_forward.1} parent=27 // pred_check_branch
        %310 = sbr.rel (%p308) target = $region44
      $region43: #{ib_inn_forward.1} parent=27 // pred_region
        %p311 = scmp.lt.s32.totalorder %s23, 3
        %s312 = scalar_select %p311, %s23, 3
        %s313 = smul.addr %s312, 8
        %s314 = scalar_lea.vmem %s4, %s313
      $region44: #{ib_inn_forward.1} parent=27 // pred_fallthru
        _
    $region28: #{ib_inn_forward.1} parent=5 // pred_fallthru
      _
    %p315 = scmp.le.s32.totalorder 1, %s15
    %p316 = scmp.lt.s32.totalorder %s15, 5
    %p317 = pnand %p315, %p316
    %p318 = pneg %p317
    // Predicated region
    $region45: #{ib_inn_forward.1} parent=5 // pred_check
      _
    $region46: #{ib_inn_forward.1} parent=5 // pred_check_branch
      %320 = sbr.rel (%p317) target = $region48
    $region47: #{ib_inn_forward.1} parent=5 // pred_region
      %s321 = ssub.s32 %s15, 1
      %s322 = smul.u32 2, %s24
      %p323 = scmp.lt.s32.totalorder %s322, 1
      %s324 = scalar_select %p323, %s322, 1
      %s325 = smul.addr %s324, 8
      %s326 = smul.addr %s325, 8
      %s327 = scalar_lea.vmem %s0, %s326
      %p328 = pneg %p53
      %p329 = pneg %p50
      %p330 = scmp.lt.s32.totalorder %s25, 3
      %s331 = scalar_select %p330, %s25, 3
      %s332 = smul.addr %s331, 64
      %s333 = smul.addr %s332, 4
      %s334 = scalar_lea.vmem %s1, %s333
      %p335 = pneg %p79
      %p336 = pneg %p76
      %p337 = scmp.lt.s32.totalorder %s25, 3
      %s338 = scalar_select %p337, %s25, 3
      %s339 = scalar_lea.vmem %s2, %s338
      %p340 = pneg %p105
      %p341 = pneg %p102
      %p342 = scmp.lt.s32.totalorder %s25, 3
      %s343 = scalar_select %p342, %s25, 3
      %s344 = smul.addr %s343, 128
      %s345 = smul.addr %s344, 4
      %s346 = scalar_lea.vmem %s3, %s345
      %p347 = pneg %p131
      %p348 = pneg %p128
      %p349 = scmp.lt.s32.totalorder %s25, 3
      %s350 = scalar_select %p349, %s25, 3
      %s351 = smul.addr %s350, 8
      %s352 = scalar_lea.vmem %s4, %s351
      %p353 = pneg %p157
      %p354 = pneg %p154
      %p355 = pneg %p178
      %p356 = pneg %p175
      %p357 = pneg %p199
      %p358 = pneg %p196
      %p359 = pneg %p225
      %p360 = pneg %p222
      %s361 = smul.u32 2, %s24
      %p362 = scmp.lt.s32.totalorder %s361, 1
      %s363 = scalar_select %p362, %s361, 1
      %s364 = smul.addr %s363, 8
      %s365 = smul.addr %s364, 8
      %s366 = scalar_lea.vmem %s7, %s365
      %p367 = pneg %p251
      %p368 = pneg %p248
      %s369 = smul.u32 2, %s24
      %p370 = scmp.lt.s32.totalorder %s369, 1
      %s371 = scalar_select %p370, %s369, 1
      %s372 = smul.addr %s371, 8
      %s373 = scalar_lea.vmem %s8, %s372
      %s374 = smul.u32 2, %s24
      %p375 = scmp.lt.s32.totalorder %s374, 1
      %s376 = scalar_select %p375, %s374, 1
      %s377 = smul.addr %s376, 8
      %s378 = smul.addr %s377, 8
      %s379 = scalar_lea.vmem %s0, %s378
      %s380 = smul.u32 2, %s24
      %p381 = scmp.lt.s32.totalorder %s25, 3
      %s382 = scalar_select %p381, %s25, 3
      %s383 = smul.addr %s382, 64
      %s384 = smul.addr %s383, 4
      %s385 = scalar_lea.vmem %s1, %s384
      %p386 = scmp.lt.s32.totalorder %s25, 3
      %s387 = scalar_select %p386, %s25, 3
      %s388 = scalar_lea.vmem %s2, %s387
      %p389 = scmp.lt.s32.totalorder %s25, 3
      %s390 = scalar_select %p389, %s25, 3
      %s391 = smul.addr %s390, 128
      %s392 = smul.addr %s391, 4
      %s393 = scalar_lea.vmem %s3, %s392
      %p394 = scmp.lt.s32.totalorder %s25, 3
      %s395 = scalar_select %p394, %s25, 3
      %s396 = smul.addr %s395, 8
      %s397 = scalar_lea.vmem %s4, %s396
      %s398 = smul.u32 2, %s24
      %p399 = scmp.lt.s32.totalorder %s398, 1
      %s400 = scalar_select %p399, %s398, 1
      %s401 = smul.addr %s400, 8
      %s402 = smul.addr %s401, 8
      %s403 = scalar_lea.vmem %s7, %s402
      %s404 = smul.u32 2, %s24
      %s405 = smul.u32 2, %s24
      %p406 = scmp.lt.s32.totalorder %s405, 1
      %s407 = scalar_select %p406, %s405, 1
      %s408 = smul.addr %s407, 8
      %s409 = scalar_lea.vmem %s8, %s408
      %s410 = smul.u32 2, %s24
      %p412 = scmp.eq.s32.totalorder %s25, 0
      // Predicated region
      $region49: #{ib_inn_forward.1} parent=47 // pred_check
        %p413 = pneg %p412
      $region50: #{ib_inn_forward.1} parent=47 // pred_check_branch
        %415 = sbr.rel (%p413) target = $region52
      $region51: #{ib_inn_forward.1} parent=47 // pred_region
        %v416 = vld [vmem:[%s379] sm:$0xff]
        %v417 = vld [vmem:[%s379 + $0x8] sm:$0xff]
        %v418 = vld [vmem:[%s379 + $0x10] sm:$0xff]
        %v419 = vld [vmem:[%s379 + $0x18] sm:$0xff]
        %v420 = vld [vmem:[%s379 + $0x20] sm:$0xff]
        %v421 = vld [vmem:[%s379 + $0x28] sm:$0xff]
        %v422 = vld [vmem:[%s379 + $0x30] sm:$0xff]
        %v423 = vld [vmem:[%s379 + $0x38] sm:$0xff]
        %v424 = vld [vmem:[%s379 + $0x40] sm:$0xff]
        %v425 = vld [vmem:[%s379 + $0x48] sm:$0xff]
        %v426 = vld [vmem:[%s379 + $0x50] sm:$0xff]
        %v427 = vld [vmem:[%s379 + $0x58] sm:$0xff]
        %v428 = vld [vmem:[%s379 + $0x60] sm:$0xff]
        %v429 = vld [vmem:[%s379 + $0x68] sm:$0xff]
        %v430 = vld [vmem:[%s379 + $0x70] sm:$0xff]
        %v431 = vld [vmem:[%s379 + $0x78] sm:$0xff]
        %432 = vst [vmem:[#allocation2] sm:$0xff] %v416
        %433 = vst [vmem:[#allocation2 + $0x8] sm:$0xff] %v417
        %434 = vst [vmem:[#allocation2 + $0x10] sm:$0xff] %v418
        %435 = vst [vmem:[#allocation2 + $0x18] sm:$0xff] %v419
        %436 = vst [vmem:[#allocation2 + $0x20] sm:$0xff] %v424
        %437 = vst [vmem:[#allocation2 + $0x28] sm:$0xff] %v425
        %438 = vst [vmem:[#allocation2 + $0x30] sm:$0xff] %v426
        %439 = vst [vmem:[#allocation2 + $0x38] sm:$0xff] %v427
        %440 = vst [vmem:[#allocation3] sm:$0xff] %v420
        %441 = vst [vmem:[#allocation3 + $0x8] sm:$0xff] %v421
        %442 = vst [vmem:[#allocation3 + $0x10] sm:$0xff] %v422
        %443 = vst [vmem:[#allocation3 + $0x18] sm:$0xff] %v423
        %444 = vst [vmem:[#allocation3 + $0x20] sm:$0xff] %v428
        %445 = vst [vmem:[#allocation3 + $0x28] sm:$0xff] %v429
        %446 = vst [vmem:[#allocation3 + $0x30] sm:$0xff] %v430
        %447 = vst [vmem:[#allocation3 + $0x38] sm:$0xff] %v431
        %vm448 = vcmask 7168
        %449 = vst.msk [vmem:[#allocation4] sm:$0xff] %vm448, 0.0
        %450 = vst.msk [vmem:[#allocation4 + $0x8] sm:$0xff] %vm448, 0.0
      $region52: #{ib_inn_forward.1} parent=47 // pred_fallthru
        _
      %v451 = vld [vmem:[#allocation2] sm:$0xff]
      %v452 = vld [vmem:[#allocation2 + $0x8] sm:$0xff]
      %v453 = vld [vmem:[#allocation2 + $0x10] sm:$0xff]
      %v454 = vld [vmem:[#allocation2 + $0x18] sm:$0xff]
      %v455 = vld [vmem:[#allocation2 + $0x20] sm:$0xff]
      %v456 = vld [vmem:[#allocation2 + $0x28] sm:$0xff]
      %v457 = vld [vmem:[#allocation2 + $0x30] sm:$0xff]
      %v458 = vld [vmem:[#allocation2 + $0x38] sm:$0xff]
      %v459 = vld [vmem:[#allocation3] sm:$0xff]
      %v460 = vld [vmem:[#allocation3 + $0x8] sm:$0xff]
      %v461 = vld [vmem:[#allocation3 + $0x10] sm:$0xff]
      %v462 = vld [vmem:[#allocation3 + $0x18] sm:$0xff]
      %v463 = vld [vmem:[#allocation3 + $0x20] sm:$0xff]
      %v464 = vld [vmem:[#allocation3 + $0x28] sm:$0xff]
      %v465 = vld [vmem:[#allocation3 + $0x30] sm:$0xff]
      %v466 = vld [vmem:[#allocation3 + $0x38] sm:$0xff]
      %v467 = vld [vmem:[%s385] sm:$0xf]
      %v468 = vld [vmem:[%s385 + $0x4] sm:$0xf]
      %v469 = vld [vmem:[%s385 + $0x8] sm:$0xf]
      %v470 = vld [vmem:[%s385 + $0xc] sm:$0xf]
      %v471 = vld [vmem:[%s385 + $0x10] sm:$0xf]
      %v472 = vld [vmem:[%s385 + $0x14] sm:$0xf]
      %v473 = vld [vmem:[%s385 + $0x18] sm:$0xf]
      %v474 = vld [vmem:[%s385 + $0x1c] sm:$0xf]
      %v475 = vld [vmem:[%s385 + $0x20] sm:$0xf]
      %v476 = vld [vmem:[%s385 + $0x24] sm:$0xf]
      %v477 = vld [vmem:[%s385 + $0x28] sm:$0xf]
      %v478 = vld [vmem:[%s385 + $0x2c] sm:$0xf]
      %v479 = vld [vmem:[%s385 + $0x30] sm:$0xf]
      %v480 = vld [vmem:[%s385 + $0x34] sm:$0xf]
      %v481 = vld [vmem:[%s385 + $0x38] sm:$0xf]
      %v482 = vld [vmem:[%s385 + $0x3c] sm:$0xf]
      %v483 = vld [vmem:[%s385 + $0x40] sm:$0xf]
      %v484 = vld [vmem:[%s385 + $0x44] sm:$0xf]
      %v485 = vld [vmem:[%s385 + $0x48] sm:$0xf]
      %v486 = vld [vmem:[%s385 + $0x4c] sm:$0xf]
      %v487 = vld [vmem:[%s385 + $0x50] sm:$0xf]
      %v488 = vld [vmem:[%s385 + $0x54] sm:$0xf]
      %v489 = vld [vmem:[%s385 + $0x58] sm:$0xf]
      %v490 = vld [vmem:[%s385 + $0x5c] sm:$0xf]
      %v491 = vld [vmem:[%s385 + $0x60] sm:$0xf]
      %v492 = vld [vmem:[%s385 + $0x64] sm:$0xf]
      %v493 = vld [vmem:[%s385 + $0x68] sm:$0xf]
      %v494 = vld [vmem:[%s385 + $0x6c] sm:$0xf]
      %v495 = vld [vmem:[%s385 + $0x70] sm:$0xf]
      %v496 = vld [vmem:[%s385 + $0x74] sm:$0xf]
      %v497 = vld [vmem:[%s385 + $0x78] sm:$0xf]
      %v498 = vld [vmem:[%s385 + $0x7c] sm:$0xf]
      %v499 = vld [vmem:[%s385 + $0x80] sm:$0xf]
      %v500 = vld [vmem:[%s385 + $0x84] sm:$0xf]
      %v501 = vld [vmem:[%s385 + $0x88] sm:$0xf]
      %v502 = vld [vmem:[%s385 + $0x8c] sm:$0xf]
      %v503 = vld [vmem:[%s385 + $0x90] sm:$0xf]
      %v504 = vld [vmem:[%s385 + $0x94] sm:$0xf]
      %v505 = vld [vmem:[%s385 + $0x98] sm:$0xf]
      %v506 = vld [vmem:[%s385 + $0x9c] sm:$0xf]
      %v507 = vld [vmem:[%s385 + $0xa0] sm:$0xf]
      %v508 = vld [vmem:[%s385 + $0xa4] sm:$0xf]
      %v509 = vld [vmem:[%s385 + $0xa8] sm:$0xf]
      %v510 = vld [vmem:[%s385 + $0xac] sm:$0xf]
      %v511 = vld [vmem:[%s385 + $0xb0] sm:$0xf]
      %v512 = vld [vmem:[%s385 + $0xb4] sm:$0xf]
      %v513 = vld [vmem:[%s385 + $0xb8] sm:$0xf]
      %v514 = vld [vmem:[%s385 + $0xbc] sm:$0xf]
      %v515 = vld [vmem:[%s385 + $0xc0] sm:$0xf]
      %v516 = vld [vmem:[%s385 + $0xc4] sm:$0xf]
      %v517 = vld [vmem:[%s385 + $0xc8] sm:$0xf]
      %v518 = vld [vmem:[%s385 + $0xcc] sm:$0xf]
      %v519 = vld [vmem:[%s385 + $0xd0] sm:$0xf]
      %v520 = vld [vmem:[%s385 + $0xd4] sm:$0xf]
      %v521 = vld [vmem:[%s385 + $0xd8] sm:$0xf]
      %v522 = vld [vmem:[%s385 + $0xdc] sm:$0xf]
      %v523 = vld [vmem:[%s385 + $0xe0] sm:$0xf]
      %v524 = vld [vmem:[%s385 + $0xe4] sm:$0xf]
      %v525 = vld [vmem:[%s385 + $0xe8] sm:$0xf]
      %v526 = vld [vmem:[%s385 + $0xec] sm:$0xf]
      %v527 = vld [vmem:[%s385 + $0xf0] sm:$0xf]
      %v528 = vld [vmem:[%s385 + $0xf4] sm:$0xf]
      %v529 = vld [vmem:[%s385 + $0xf8] sm:$0xf]
      %v530 = vld [vmem:[%s385 + $0xfc] sm:$0xf]
      %v531 = vld [vmem:[%s388] sm:$0x1]
      %v532 = vld [vmem:[%s393] sm:$0xff]
      %v533 = vld [vmem:[%s393 + $0x8] sm:$0xff]
      %v534 = vld [vmem:[%s393 + $0x10] sm:$0xff]
      %v535 = vld [vmem:[%s393 + $0x18] sm:$0xff]
      %v536 = vld [vmem:[%s393 + $0x20] sm:$0xff]
      %v537 = vld [vmem:[%s393 + $0x28] sm:$0xff]
      %v538 = vld [vmem:[%s393 + $0x30] sm:$0xff]
      %v539 = vld [vmem:[%s393 + $0x38] sm:$0xff]
      %v540 = vld [vmem:[%s393 + $0x40] sm:$0xff]
      %v541 = vld [vmem:[%s393 + $0x48] sm:$0xff]
      %v542 = vld [vmem:[%s393 + $0x50] sm:$0xff]
      %v543 = vld [vmem:[%s393 + $0x58] sm:$0xff]
      %v544 = vld [vmem:[%s393 + $0x60] sm:$0xff]
      %v545 = vld [vmem:[%s393 + $0x68] sm:$0xff]
      %v546 = vld [vmem:[%s393 + $0x70] sm:$0xff]
      %v547 = vld [vmem:[%s393 + $0x78] sm:$0xff]
      %v548 = vld [vmem:[%s393 + $0x80] sm:$0xff]
      %v549 = vld [vmem:[%s393 + $0x88] sm:$0xff]
      %v550 = vld [vmem:[%s393 + $0x90] sm:$0xff]
      %v551 = vld [vmem:[%s393 + $0x98] sm:$0xff]
      %v552 = vld [vmem:[%s393 + $0xa0] sm:$0xff]
      %v553 = vld [vmem:[%s393 + $0xa8] sm:$0xff]
      %v554 = vld [vmem:[%s393 + $0xb0] sm:$0xff]
      %v555 = vld [vmem:[%s393 + $0xb8] sm:$0xff]
      %v556 = vld [vmem:[%s393 + $0xc0] sm:$0xff]
      %v557 = vld [vmem:[%s393 + $0xc8] sm:$0xff]
      %v558 = vld [vmem:[%s393 + $0xd0] sm:$0xff]
      %v559 = vld [vmem:[%s393 + $0xd8] sm:$0xff]
      %v560 = vld [vmem:[%s393 + $0xe0] sm:$0xff]
      %v561 = vld [vmem:[%s393 + $0xe8] sm:$0xff]
      %v562 = vld [vmem:[%s393 + $0xf0] sm:$0xff]
      %v563 = vld [vmem:[%s393 + $0xf8] sm:$0xff]
      %v564 = vld [vmem:[%s393 + $0x100] sm:$0xff]
      %v565 = vld [vmem:[%s393 + $0x108] sm:$0xff]
      %v566 = vld [vmem:[%s393 + $0x110] sm:$0xff]
      %v567 = vld [vmem:[%s393 + $0x118] sm:$0xff]
      %v568 = vld [vmem:[%s393 + $0x120] sm:$0xff]
      %v569 = vld [vmem:[%s393 + $0x128] sm:$0xff]
      %v570 = vld [vmem:[%s393 + $0x130] sm:$0xff]
      %v571 = vld [vmem:[%s393 + $0x138] sm:$0xff]
      %v572 = vld [vmem:[%s393 + $0x140] sm:$0xff]
      %v573 = vld [vmem:[%s393 + $0x148] sm:$0xff]
      %v574 = vld [vmem:[%s393 + $0x150] sm:$0xff]
      %v575 = vld [vmem:[%s393 + $0x158] sm:$0xff]
      %v576 = vld [vmem:[%s393 + $0x160] sm:$0xff]
      %v577 = vld [vmem:[%s393 + $0x168] sm:$0xff]
      %v578 = vld [vmem:[%s393 + $0x170] sm:$0xff]
      %v579 = vld [vmem:[%s393 + $0x178] sm:$0xff]
      %v580 = vld [vmem:[%s393 + $0x180] sm:$0xff]
      %v581 = vld [vmem:[%s393 + $0x188] sm:$0xff]
      %v582 = vld [vmem:[%s393 + $0x190] sm:$0xff]
      %v583 = vld [vmem:[%s393 + $0x198] sm:$0xff]
      %v584 = vld [vmem:[%s393 + $0x1a0] sm:$0xff]
      %v585 = vld [vmem:[%s393 + $0x1a8] sm:$0xff]
      %v586 = vld [vmem:[%s393 + $0x1b0] sm:$0xff]
      %v587 = vld [vmem:[%s393 + $0x1b8] sm:$0xff]
      %v588 = vld [vmem:[%s393 + $0x1c0] sm:$0xff]
      %v589 = vld [vmem:[%s393 + $0x1c8] sm:$0xff]
      %v590 = vld [vmem:[%s393 + $0x1d0] sm:$0xff]
      %v591 = vld [vmem:[%s393 + $0x1d8] sm:$0xff]
      %v592 = vld [vmem:[%s393 + $0x1e0] sm:$0xff]
      %v593 = vld [vmem:[%s393 + $0x1e8] sm:$0xff]
      %v594 = vld [vmem:[%s393 + $0x1f0] sm:$0xff]
      %v595 = vld [vmem:[%s393 + $0x1f8] sm:$0xff]
      %v596 = vld [vmem:[%s397] sm:$0xff]
      %v597 = vpack.c.bf16 %v455, %v451
      %v598 = vpack.c.bf16 %v456, %v452
      %v599 = vpack.c.bf16 %v457, %v453
      %v600 = vpack.c.bf16 %v458, %v454
      %v602 = vlaneseq
      %v603 = vshrl.u32 %v602, 7
      %v604 = vsub.s32 0, %v603
      %v605 = vrot.slane %v531, %v604
      %v671 = vunpack.c.l.b16 %v467
      %v672 = vunpack.c.l.b16 %v468
      %v673 = vunpack.c.l.b16 %v469
      %v674 = vunpack.c.l.b16 %v470
      %v675 = vunpack.c.l.b16 %v471
      %v676 = vunpack.c.l.b16 %v472
      %v677 = vunpack.c.l.b16 %v473
      %v678 = vunpack.c.l.b16 %v474
      %v679 = vunpack.c.l.b16 %v475
      %v680 = vunpack.c.l.b16 %v476
      %v681 = vunpack.c.l.b16 %v477
      %v682 = vunpack.c.l.b16 %v478
      %v683 = vunpack.c.l.b16 %v479
      %v684 = vunpack.c.l.b16 %v480
      %v685 = vunpack.c.l.b16 %v481
      %v686 = vunpack.c.l.b16 %v482
      %v687 = vunpack.c.l.b16 %v483
      %v688 = vunpack.c.l.b16 %v484
      %v689 = vunpack.c.l.b16 %v485
      %v690 = vunpack.c.l.b16 %v486
      %v691 = vunpack.c.l.b16 %v487
      %v692 = vunpack.c.l.b16 %v488
      %v693 = vunpack.c.l.b16 %v489
      %v694 = vunpack.c.l.b16 %v490
      %v695 = vunpack.c.l.b16 %v491
      %v696 = vunpack.c.l.b16 %v492
      %v697 = vunpack.c.l.b16 %v493
      %v698 = vunpack.c.l.b16 %v494
      %v699 = vunpack.c.l.b16 %v495
      %v700 = vunpack.c.l.b16 %v496
      %v701 = vunpack.c.l.b16 %v497
      %v702 = vunpack.c.l.b16 %v498
      %v703 = vunpack.c.l.b16 %v499
      %v704 = vunpack.c.l.b16 %v500
      %v705 = vunpack.c.l.b16 %v501
      %v706 = vunpack.c.l.b16 %v502
      %v707 = vunpack.c.l.b16 %v503
      %v708 = vunpack.c.l.b16 %v504
      %v709 = vunpack.c.l.b16 %v505
      %v710 = vunpack.c.l.b16 %v506
      %v711 = vunpack.c.l.b16 %v507
      %v712 = vunpack.c.l.b16 %v508
      %v713 = vunpack.c.l.b16 %v509
      %v714 = vunpack.c.l.b16 %v510
      %v715 = vunpack.c.l.b16 %v511
      %v716 = vunpack.c.l.b16 %v512
      %v717 = vunpack.c.l.b16 %v513
      %v718 = vunpack.c.l.b16 %v514
      %v719 = vunpack.c.l.b16 %v515
      %v720 = vunpack.c.l.b16 %v516
      %v721 = vunpack.c.l.b16 %v517
      %v722 = vunpack.c.l.b16 %v518
      %v723 = vunpack.c.l.b16 %v519
      %v724 = vunpack.c.l.b16 %v520
      %v725 = vunpack.c.l.b16 %v521
      %v726 = vunpack.c.l.b16 %v522
      %v727 = vunpack.c.l.b16 %v523
      %v728 = vunpack.c.l.b16 %v524
      %v729 = vunpack.c.l.b16 %v525
      %v730 = vunpack.c.l.b16 %v526
      %v731 = vunpack.c.l.b16 %v527
      %v732 = vunpack.c.l.b16 %v528
      %v733 = vunpack.c.l.b16 %v529
      %v734 = vunpack.c.l.b16 %v530
      %v735 = vpack.c.b16 %v672, %v671
      %v736 = vpack.c.b16 %v674, %v673
      %v737 = vpack.c.b16 %v676, %v675
      %v738 = vpack.c.b16 %v678, %v677
      %v739 = vpack.c.b16 %v680, %v679
      %v740 = vpack.c.b16 %v682, %v681
      %v741 = vpack.c.b16 %v684, %v683
      %v742 = vpack.c.b16 %v686, %v685
      %v743 = vpack.c.b16 %v688, %v687
      %v744 = vpack.c.b16 %v690, %v689
      %v745 = vpack.c.b16 %v692, %v691
      %v746 = vpack.c.b16 %v694, %v693
      %v747 = vpack.c.b16 %v696, %v695
      %v748 = vpack.c.b16 %v698, %v697
      %v749 = vpack.c.b16 %v700, %v699
      %v750 = vpack.c.b16 %v702, %v701
      %v751 = vpack.c.b16 %v704, %v703
      %v752 = vpack.c.b16 %v706, %v705
      %v753 = vpack.c.b16 %v708, %v707
      %v754 = vpack.c.b16 %v710, %v709
      %v755 = vpack.c.b16 %v712, %v711
      %v756 = vpack.c.b16 %v714, %v713
      %v757 = vpack.c.b16 %v716, %v715
      %v758 = vpack.c.b16 %v718, %v717
      %v759 = vpack.c.b16 %v720, %v719
      %v760 = vpack.c.b16 %v722, %v721
      %v761 = vpack.c.b16 %v724, %v723
      %v762 = vpack.c.b16 %v726, %v725
      %v763 = vpack.c.b16 %v728, %v727
      %v764 = vpack.c.b16 %v730, %v729
      %v765 = vpack.c.b16 %v732, %v731
      %v766 = vpack.c.b16 %v734, %v733
      %799 = vmatprep.subr.bf16.mxu0 0
      %800 = vmatpush1.bf16.msra.mxu0 %v735
      %801 = vmatprep.subr.bf16.mxu0 0
      %802 = vmatpush1.bf16.msra.mxu0 %v736
      %803 = vmatprep.subr.bf16.mxu0 0
      %804 = vmatpush1.bf16.msra.mxu0 %v737
      %805 = vmatprep.subr.bf16.mxu0 0
      %806 = vmatpush1.bf16.msra.mxu0 %v738
      %807 = vmatprep.subr.bf16.mxu0 0
      %808 = vmatpush1.bf16.msra.mxu0 %v739
      %809 = vmatprep.subr.bf16.mxu0 0
      %810 = vmatpush1.bf16.msra.mxu0 %v740
      %811 = vmatprep.subr.bf16.mxu0 0
      %812 = vmatpush1.bf16.msra.mxu0 %v741
      %813 = vmatprep.subr.bf16.mxu0 0
      %814 = vmatpush1.bf16.msra.mxu0 %v742
      %815 = vmatprep.subr.bf16.mxu0 0
      %816 = vmatpush1.bf16.msra.mxu0 %v743
      %817 = vmatprep.subr.bf16.mxu0 0
      %818 = vmatpush1.bf16.msra.mxu0 %v744
      %819 = vmatprep.subr.bf16.mxu0 0
      %820 = vmatpush1.bf16.msra.mxu0 %v745
      %821 = vmatprep.subr.bf16.mxu0 0
      %822 = vmatpush1.bf16.msra.mxu0 %v746
      %823 = vmatprep.subr.bf16.mxu0 0
      %824 = vmatpush1.bf16.msra.mxu0 %v747
      %825 = vmatprep.subr.bf16.mxu0 0
      %826 = vmatpush1.bf16.msra.mxu0 %v748
      %827 = vmatprep.subr.bf16.mxu0 0
      %828 = vmatpush1.bf16.msra.mxu0 %v749
      %829 = vmatprep.subr.bf16.mxu0 0
      %830 = vmatpush1.bf16.msra.mxu0 %v750
      %831 = vmatprep.mubr.bf16.mxu0 %v598
      %832 = vmatmul.mubr.bf16.gmra.mrb[0].mxu0 %v597
      %v833 = vpop.f32.mrb[0].mxu0
      %v834 = vadd.f32 %v605, %v833
      %v835 = vpop.f32.mrb[0].mxu0
      %v836 = vpop.f32.mrb[0].mxu0
      %v837 = vadd.f32 %v605, %v836
      %v838 = vpop.f32.mrb[0].mxu0
      %839 = vdwg.mxu0
      %840 = vmatprep.subr.bf16.mxu0 0
      %841 = vmatpush1.bf16.msra.mxu0 %v751
      %842 = vmatprep.subr.bf16.mxu0 0
      %843 = vmatpush1.bf16.msra.mxu0 %v752
      %844 = vmatprep.subr.bf16.mxu0 0
      %845 = vmatpush1.bf16.msra.mxu0 %v753
      %846 = vmatprep.subr.bf16.mxu0 0
      %847 = vmatpush1.bf16.msra.mxu0 %v754
      %848 = vmatprep.subr.bf16.mxu0 0
      %849 = vmatpush1.bf16.msra.mxu0 %v755
      %850 = vmatprep.subr.bf16.mxu0 0
      %851 = vmatpush1.bf16.msra.mxu0 %v756
      %852 = vmatprep.subr.bf16.mxu0 0
      %853 = vmatpush1.bf16.msra.mxu0 %v757
      %854 = vmatprep.subr.bf16.mxu0 0
      %855 = vmatpush1.bf16.msra.mxu0 %v758
      %856 = vmatprep.subr.bf16.mxu0 0
      %857 = vmatpush1.bf16.msra.mxu0 %v759
      %858 = vmatprep.subr.bf16.mxu0 0
      %859 = vmatpush1.bf16.msra.mxu0 %v760
      %860 = vmatprep.subr.bf16.mxu0 0
      %861 = vmatpush1.bf16.msra.mxu0 %v761
      %862 = vmatprep.subr.bf16.mxu0 0
      %863 = vmatpush1.bf16.msra.mxu0 %v762
      %864 = vmatprep.subr.bf16.mxu0 0
      %865 = vmatpush1.bf16.msra.mxu0 %v763
      %866 = vmatprep.subr.bf16.mxu0 0
      %867 = vmatpush1.bf16.msra.mxu0 %v764
      %868 = vmatprep.subr.bf16.mxu0 0
      %869 = vmatpush1.bf16.msra.mxu0 %v765
      %870 = vmatprep.subr.bf16.mxu0 0
      %871 = vmatpush1.bf16.msra.mxu0 %v766
      %872 = vmatprep.mubr.bf16.mxu0 %v600
      %873 = vmatmul.mubr.bf16.gmra.mrb[0].mxu0 %v599
      %v874 = vpop.f32.mrb[0].mxu0
      %v875 = vadd.f32 %v834, %v874
      %v876 = vpop.f32.mrb[0].mxu0
      %v877 = vpop.f32.mrb[0].mxu0
      %v878 = vadd.f32 %v837, %v877
      %v879 = vpop.f32.mrb[0].mxu0
      %880 = vdwg.mxu0
      %v881 = vmax.f32 %v875, 0.0
      %v882 = vmax.f32 %v878, 0.0
      %v883 = vpack.c.bf16 %v882, %v881
      %v885 = vlaneseq
      %v886 = vshrl.u32 %v885, 7
      %v887 = vsub.s32 0, %v886
      %v888 = vrot.slane %v596, %v887
      %v889 = vlaneseq
      %v890 = vshrl.u32 %v889, 7
      %v891 = vsub.s32 1, %v890
      %v892 = vrot.slane %v596, %v891
      %v893 = vlaneseq
      %v894 = vshrl.u32 %v893, 7
      %v895 = vsub.s32 2, %v894
      %v896 = vrot.slane %v596, %v895
      %v897 = vlaneseq
      %v898 = vshrl.u32 %v897, 7
      %v899 = vsub.s32 3, %v898
      %v900 = vrot.slane %v596, %v899
      %v901 = vlaneseq
      %v902 = vshrl.u32 %v901, 7
      %v903 = vsub.s32 4, %v902
      %v904 = vrot.slane %v596, %v903
      %v905 = vlaneseq
      %v906 = vshrl.u32 %v905, 7
      %v907 = vsub.s32 5, %v906
      %v908 = vrot.slane %v596, %v907
      %v909 = vlaneseq
      %v910 = vshrl.u32 %v909, 7
      %v911 = vsub.s32 6, %v910
      %v912 = vrot.slane %v596, %v911
      %v913 = vlaneseq
      %v914 = vshrl.u32 %v913, 7
      %v915 = vsub.s32 7, %v914
      %v916 = vrot.slane %v596, %v915
      %v989 = vunpack.c.l.b16 %v532
      %v990 = vunpack.c.h.b16 %v532
      %v991 = vunpack.c.l.b16 %v533
      %v992 = vunpack.c.h.b16 %v533
      %v993 = vunpack.c.l.b16 %v534
      %v994 = vunpack.c.h.b16 %v534
      %v995 = vunpack.c.l.b16 %v535
      %v996 = vunpack.c.h.b16 %v535
      %v997 = vunpack.c.l.b16 %v536
      %v998 = vunpack.c.h.b16 %v536
      %v999 = vunpack.c.l.b16 %v537
      %v1000 = vunpack.c.h.b16 %v537
      %v1001 = vunpack.c.l.b16 %v538
      %v1002 = vunpack.c.h.b16 %v538
      %v1003 = vunpack.c.l.b16 %v539
      %v1004 = vunpack.c.h.b16 %v539
      %v1005 = vunpack.c.l.b16 %v540
      %v1006 = vunpack.c.h.b16 %v540
      %v1007 = vunpack.c.l.b16 %v541
      %v1008 = vunpack.c.h.b16 %v541
      %v1009 = vunpack.c.l.b16 %v542
      %v1010 = vunpack.c.h.b16 %v542
      %v1011 = vunpack.c.l.b16 %v543
      %v1012 = vunpack.c.h.b16 %v543
      %v1013 = vunpack.c.l.b16 %v544
      %v1014 = vunpack.c.h.b16 %v544
      %v1015 = vunpack.c.l.b16 %v545
      %v1016 = vunpack.c.h.b16 %v545
      %v1017 = vunpack.c.l.b16 %v546
      %v1018 = vunpack.c.h.b16 %v546
      %v1019 = vunpack.c.l.b16 %v547
      %v1020 = vunpack.c.h.b16 %v547
      %v1021 = vunpack.c.l.b16 %v548
      %v1022 = vunpack.c.h.b16 %v548
      %v1023 = vunpack.c.l.b16 %v549
      %v1024 = vunpack.c.h.b16 %v549
      %v1025 = vunpack.c.l.b16 %v550
      %v1026 = vunpack.c.h.b16 %v550
      %v1027 = vunpack.c.l.b16 %v551
      %v1028 = vunpack.c.h.b16 %v551
      %v1029 = vunpack.c.l.b16 %v552
      %v1030 = vunpack.c.h.b16 %v552
      %v1031 = vunpack.c.l.b16 %v553
      %v1032 = vunpack.c.h.b16 %v553
      %v1033 = vunpack.c.l.b16 %v554
      %v1034 = vunpack.c.h.b16 %v554
      %v1035 = vunpack.c.l.b16 %v555
      %v1036 = vunpack.c.h.b16 %v555
      %v1037 = vunpack.c.l.b16 %v556
      %v1038 = vunpack.c.h.b16 %v556
      %v1039 = vunpack.c.l.b16 %v557
      %v1040 = vunpack.c.h.b16 %v557
      %v1041 = vunpack.c.l.b16 %v558
      %v1042 = vunpack.c.h.b16 %v558
      %v1043 = vunpack.c.l.b16 %v559
      %v1044 = vunpack.c.h.b16 %v559
      %v1045 = vunpack.c.l.b16 %v560
      %v1046 = vunpack.c.h.b16 %v560
      %v1047 = vunpack.c.l.b16 %v561
      %v1048 = vunpack.c.h.b16 %v561
      %v1049 = vunpack.c.l.b16 %v562
      %v1050 = vunpack.c.h.b16 %v562
      %v1051 = vunpack.c.l.b16 %v563
      %v1052 = vunpack.c.h.b16 %v563
      %v1053 = vunpack.c.l.b16 %v564
      %v1054 = vunpack.c.h.b16 %v564
      %v1055 = vunpack.c.l.b16 %v565
      %v1056 = vunpack.c.h.b16 %v565
      %v1057 = vunpack.c.l.b16 %v566
      %v1058 = vunpack.c.h.b16 %v566
      %v1059 = vunpack.c.l.b16 %v567
      %v1060 = vunpack.c.h.b16 %v567
      %v1061 = vunpack.c.l.b16 %v568
      %v1062 = vunpack.c.h.b16 %v568
      %v1063 = vunpack.c.l.b16 %v569
      %v1064 = vunpack.c.h.b16 %v569
      %v1065 = vunpack.c.l.b16 %v570
      %v1066 = vunpack.c.h.b16 %v570
      %v1067 = vunpack.c.l.b16 %v571
      %v1068 = vunpack.c.h.b16 %v571
      %v1069 = vunpack.c.l.b16 %v572
      %v1070 = vunpack.c.h.b16 %v572
      %v1071 = vunpack.c.l.b16 %v573
      %v1072 = vunpack.c.h.b16 %v573
      %v1073 = vunpack.c.l.b16 %v574
      %v1074 = vunpack.c.h.b16 %v574
      %v1075 = vunpack.c.l.b16 %v575
      %v1076 = vunpack.c.h.b16 %v575
      %v1077 = vunpack.c.l.b16 %v576
      %v1078 = vunpack.c.h.b16 %v576
      %v1079 = vunpack.c.l.b16 %v577
      %v1080 = vunpack.c.h.b16 %v577
      %v1081 = vunpack.c.l.b16 %v578
      %v1082 = vunpack.c.h.b16 %v578
      %v1083 = vunpack.c.l.b16 %v579
      %v1084 = vunpack.c.h.b16 %v579
      %v1085 = vunpack.c.l.b16 %v580
      %v1086 = vunpack.c.h.b16 %v580
      %v1087 = vunpack.c.l.b16 %v581
      %v1088 = vunpack.c.h.b16 %v581
      %v1089 = vunpack.c.l.b16 %v582
      %v1090 = vunpack.c.h.b16 %v582
      %v1091 = vunpack.c.l.b16 %v583
      %v1092 = vunpack.c.h.b16 %v583
      %v1093 = vunpack.c.l.b16 %v584
      %v1094 = vunpack.c.h.b16 %v584
      %v1095 = vunpack.c.l.b16 %v585
      %v1096 = vunpack.c.h.b16 %v585
      %v1097 = vunpack.c.l.b16 %v586
      %v1098 = vunpack.c.h.b16 %v586
      %v1099 = vunpack.c.l.b16 %v587
      %v1100 = vunpack.c.h.b16 %v587
      %v1101 = vunpack.c.l.b16 %v588
      %v1102 = vunpack.c.h.b16 %v588
      %v1103 = vunpack.c.l.b16 %v589
      %v1104 = vunpack.c.h.b16 %v589
      %v1105 = vunpack.c.l.b16 %v590
      %v1106 = vunpack.c.h.b16 %v590
      %v1107 = vunpack.c.l.b16 %v591
      %v1108 = vunpack.c.h.b16 %v591
      %v1109 = vunpack.c.l.b16 %v592
      %v1110 = vunpack.c.h.b16 %v592
      %v1111 = vunpack.c.l.b16 %v593
      %v1112 = vunpack.c.h.b16 %v593
      %v1113 = vunpack.c.l.b16 %v594
      %v1114 = vunpack.c.h.b16 %v594
      %v1115 = vunpack.c.l.b16 %v595
      %v1116 = vunpack.c.h.b16 %v595
      %v1117 = vpack.c.b16 %v997, %v989
      %v1118 = vpack.c.b16 %v998, %v990
      %v1119 = vpack.c.b16 %v999, %v991
      %v1120 = vpack.c.b16 %v1000, %v992
      %v1121 = vpack.c.b16 %v1001, %v993
      %v1122 = vpack.c.b16 %v1002, %v994
      %v1123 = vpack.c.b16 %v1003, %v995
      %v1124 = vpack.c.b16 %v1004, %v996
      %v1125 = vpack.c.b16 %v1013, %v1005
      %v1126 = vpack.c.b16 %v1014, %v1006
      %v1127 = vpack.c.b16 %v1015, %v1007
      %v1128 = vpack.c.b16 %v1016, %v1008
      %v1129 = vpack.c.b16 %v1017, %v1009
      %v1130 = vpack.c.b16 %v1018, %v1010
      %v1131 = vpack.c.b16 %v1019, %v1011
      %v1132 = vpack.c.b16 %v1020, %v1012
      %v1133 = vpack.c.b16 %v1029, %v1021
      %v1134 = vpack.c.b16 %v1030, %v1022
      %v1135 = vpack.c.b16 %v1031, %v1023
      %v1136 = vpack.c.b16 %v1032, %v1024
      %v1137 = vpack.c.b16 %v1033, %v1025
      %v1138 = vpack.c.b16 %v1034, %v1026
      %v1139 = vpack.c.b16 %v1035, %v1027
      %v1140 = vpack.c.b16 %v1036, %v1028
      %v1141 = vpack.c.b16 %v1045, %v1037
      %v1142 = vpack.c.b16 %v1046, %v1038
      %v1143 = vpack.c.b16 %v1047, %v1039
      %v1144 = vpack.c.b16 %v1048, %v1040
      %v1145 = vpack.c.b16 %v1049, %v1041
      %v1146 = vpack.c.b16 %v1050, %v1042
      %v1147 = vpack.c.b16 %v1051, %v1043
      %v1148 = vpack.c.b16 %v1052, %v1044
      %v1149 = vpack.c.b16 %v1061, %v1053
      %v1150 = vpack.c.b16 %v1062, %v1054
      %v1151 = vpack.c.b16 %v1063, %v1055
      %v1152 = vpack.c.b16 %v1064, %v1056
      %v1153 = vpack.c.b16 %v1065, %v1057
      %v1154 = vpack.c.b16 %v1066, %v1058
      %v1155 = vpack.c.b16 %v1067, %v1059
      %v1156 = vpack.c.b16 %v1068, %v1060
      %v1157 = vpack.c.b16 %v1077, %v1069
      %v1158 = vpack.c.b16 %v1078, %v1070
      %v1159 = vpack.c.b16 %v1079, %v1071
      %v1160 = vpack.c.b16 %v1080, %v1072
      %v1161 = vpack.c.b16 %v1081, %v1073
      %v1162 = vpack.c.b16 %v1082, %v1074
      %v1163 = vpack.c.b16 %v1083, %v1075
      %v1164 = vpack.c.b16 %v1084, %v1076
      %v1165 = vpack.c.b16 %v1093, %v1085
      %v1166 = vpack.c.b16 %v1094, %v1086
      %v1167 = vpack.c.b16 %v1095, %v1087
      %v1168 = vpack.c.b16 %v1096, %v1088
      %v1169 = vpack.c.b16 %v1097, %v1089
      %v1170 = vpack.c.b16 %v1098, %v1090
      %v1171 = vpack.c.b16 %v1099, %v1091
      %v1172 = vpack.c.b16 %v1100, %v1092
      %v1173 = vpack.c.b16 %v1109, %v1101
      %v1174 = vpack.c.b16 %v1110, %v1102
      %v1175 = vpack.c.b16 %v1111, %v1103
      %v1176 = vpack.c.b16 %v1112, %v1104
      %v1177 = vpack.c.b16 %v1113, %v1105
      %v1178 = vpack.c.b16 %v1114, %v1106
      %v1179 = vpack.c.b16 %v1115, %v1107
      %v1180 = vpack.c.b16 %v1116, %v1108
      %1245 = vmatprep.subr.bf16.mxu0 %v1118
      %1246 = vmatpush1.bf16.msra.mxu0 %v1117
      %1247 = vmatprep.subr.bf16.mxu0 %v1126
      %1248 = vmatpush1.bf16.msra.mxu0 %v1125
      %1249 = vmatprep.subr.bf16.mxu0 %v1134
      %1250 = vmatpush1.bf16.msra.mxu0 %v1133
      %1251 = vmatprep.subr.bf16.mxu0 %v1142
      %1252 = vmatpush1.bf16.msra.mxu0 %v1141
      %1253 = vmatprep.subr.bf16.mxu0 %v1150
      %1254 = vmatpush1.bf16.msra.mxu0 %v1149
      %1255 = vmatprep.subr.bf16.mxu0 %v1158
      %1256 = vmatpush1.bf16.msra.mxu0 %v1157
      %1257 = vmatprep.subr.bf16.mxu0 %v1166
      %1258 = vmatpush1.bf16.msra.mxu0 %v1165
      %1259 = vmatprep.subr.bf16.mxu0 %v1174
      %1260 = vmatpush1.bf16.msra.mxu0 %v1173
      %1261 = vmatprep.subr.bf16.mxu0 0
      %1262 = vmatpush1.bf16.msra.mxu0 0
      %1263 = vmatprep.subr.bf16.mxu0 0
      %1264 = vmatpush1.bf16.msra.mxu0 0
      %1265 = vmatprep.subr.bf16.mxu0 0
      %1266 = vmatpush1.bf16.msra.mxu0 0
      %1267 = vmatprep.subr.bf16.mxu0 0
      %1268 = vmatpush1.bf16.msra.mxu0 0
      %1269 = vmatprep.subr.bf16.mxu0 0
      %1270 = vmatpush1.bf16.msra.mxu0 0
      %1271 = vmatprep.subr.bf16.mxu0 0
      %1272 = vmatpush1.bf16.msra.mxu0 0
      %1273 = vmatprep.subr.bf16.mxu0 0
      %1274 = vmatpush1.bf16.msra.mxu0 0
      %1275 = vmatprep.subr.bf16.mxu0 0
      %1276 = vmatpush1.bf16.msra.mxu0 0
      %1277 = vmatprep.mubr.bf16.mxu0 0
      %1278 = vmatmul.mubr.bf16.gmra.mrb[0].mxu0 %v883
      %v1279 = vpop.f32.mrb[0].mxu0
      %v1280 = vadd.f32 %v888, %v1279
      %v1281 = vpop.f32.mrb[0].mxu0
      %v1282 = vadd.f32 %v892, %v1281
      %v1283 = vpop.f32.mrb[0].mxu0
      %v1284 = vadd.f32 %v888, %v1283
      %v1285 = vpop.f32.mrb[0].mxu0
      %v1286 = vadd.f32 %v892, %v1285
      %1287 = vdwg.mxu0
      %1288 = vmatprep.subr.bf16.mxu0 %v1120
      %1289 = vmatpush1.bf16.msra.mxu0 %v1119
      %1290 = vmatprep.subr.bf16.mxu0 %v1128
      %1291 = vmatpush1.bf16.msra.mxu0 %v1127
      %1292 = vmatprep.subr.bf16.mxu0 %v1136
      %1293 = vmatpush1.bf16.msra.mxu0 %v1135
      %1294 = vmatprep.subr.bf16.mxu0 %v1144
      %1295 = vmatpush1.bf16.msra.mxu0 %v1143
      %1296 = vmatprep.subr.bf16.mxu0 %v1152
      %1297 = vmatpush1.bf16.msra.mxu0 %v1151
      %1298 = vmatprep.subr.bf16.mxu0 %v1160
      %1299 = vmatpush1.bf16.msra.mxu0 %v1159
      %1300 = vmatprep.subr.bf16.mxu0 %v1168
      %1301 = vmatpush1.bf16.msra.mxu0 %v1167
      %1302 = vmatprep.subr.bf16.mxu0 %v1176
      %1303 = vmatpush1.bf16.msra.mxu0 %v1175
      %1304 = vmatprep.subr.bf16.mxu0 0
      %1305 = vmatpush1.bf16.msra.mxu0 0
      %1306 = vmatprep.subr.bf16.mxu0 0
      %1307 = vmatpush1.bf16.msra.mxu0 0
      %1308 = vmatprep.subr.bf16.mxu0 0
      %1309 = vmatpush1.bf16.msra.mxu0 0
      %1310 = vmatprep.subr.bf16.mxu0 0
      %1311 = vmatpush1.bf16.msra.mxu0 0
      %1312 = vmatprep.subr.bf16.mxu0 0
      %1313 = vmatpush1.bf16.msra.mxu0 0
      %1314 = vmatprep.subr.bf16.mxu0 0
      %1315 = vmatpush1.bf16.msra.mxu0 0
      %1316 = vmatprep.subr.bf16.mxu0 0
      %1317 = vmatpush1.bf16.msra.mxu0 0
      %1318 = vmatprep.subr.bf16.mxu0 0
      %1319 = vmatpush1.bf16.msra.mxu0 0
      %1320 = vmatprep.mubr.bf16.mxu0 0
      %1321 = vmatmul.mubr.bf16.gmra.mrb[0].mxu0 %v883
      %v1322 = vpop.f32.mrb[0].mxu0
      %v1323 = vadd.f32 %v896, %v1322
      %v1324 = vpop.f32.mrb[0].mxu0
      %v1325 = vadd.f32 %v900, %v1324
      %v1326 = vpop.f32.mrb[0].mxu0
      %v1327 = vadd.f32 %v896, %v1326
      %v1328 = vpop.f32.mrb[0].mxu0
      %v1329 = vadd.f32 %v900, %v1328
      %1330 = vdwg.mxu0
      %1331 = vmatprep.subr.bf16.mxu0 %v1122
      %1332 = vmatpush1.bf16.msra.mxu0 %v1121
      %1333 = vmatprep.subr.bf16.mxu0 %v1130
      %1334 = vmatpush1.bf16.msra.mxu0 %v1129
      %1335 = vmatprep.subr.bf16.mxu0 %v1138
      %1336 = vmatpush1.bf16.msra.mxu0 %v1137
      %1337 = vmatprep.subr.bf16.mxu0 %v1146
      %1338 = vmatpush1.bf16.msra.mxu0 %v1145
      %1339 = vmatprep.subr.bf16.mxu0 %v1154
      %1340 = vmatpush1.bf16.msra.mxu0 %v1153
      %1341 = vmatprep.subr.bf16.mxu0 %v1162
      %1342 = vmatpush1.bf16.msra.mxu0 %v1161
      %1343 = vmatprep.subr.bf16.mxu0 %v1170
      %1344 = vmatpush1.bf16.msra.mxu0 %v1169
      %1345 = vmatprep.subr.bf16.mxu0 %v1178
      %1346 = vmatpush1.bf16.msra.mxu0 %v1177
      %1347 = vmatprep.subr.bf16.mxu0 0
      %1348 = vmatpush1.bf16.msra.mxu0 0
      %1349 = vmatprep.subr.bf16.mxu0 0
      %1350 = vmatpush1.bf16.msra.mxu0 0
      %1351 = vmatprep.subr.bf16.mxu0 0
      %1352 = vmatpush1.bf16.msra.mxu0 0
      %1353 = vmatprep.subr.bf16.mxu0 0
      %1354 = vmatpush1.bf16.msra.mxu0 0
      %1355 = vmatprep.subr.bf16.mxu0 0
      %1356 = vmatpush1.bf16.msra.mxu0 0
      %1357 = vmatprep.subr.bf16.mxu0 0
      %1358 = vmatpush1.bf16.msra.mxu0 0
      %1359 = vmatprep.subr.bf16.mxu0 0
      %1360 = vmatpush1.bf16.msra.mxu0 0
      %1361 = vmatprep.subr.bf16.mxu0 0
      %1362 = vmatpush1.bf16.msra.mxu0 0
      %1363 = vmatprep.mubr.bf16.mxu0 0
      %1364 = vmatmul.mubr.bf16.gmra.mrb[0].mxu0 %v883
      %v1365 = vpop.f32.mrb[0].mxu0
      %v1366 = vadd.f32 %v904, %v1365
      %v1367 = vpop.f32.mrb[0].mxu0
      %v1368 = vadd.f32 %v908, %v1367
      %v1369 = vpop.f32.mrb[0].mxu0
      %v1370 = vadd.f32 %v904, %v1369
      %v1371 = vpop.f32.mrb[0].mxu0
      %v1372 = vadd.f32 %v908, %v1371
      %1373 = vdwg.mxu0
      %1374 = vmatprep.subr.bf16.mxu0 %v1124
      %1375 = vmatpush1.bf16.msra.mxu0 %v1123
      %1376 = vmatprep.subr.bf16.mxu0 %v1132
      %1377 = vmatpush1.bf16.msra.mxu0 %v1131
      %1378 = vmatprep.subr.bf16.mxu0 %v1140
      %1379 = vmatpush1.bf16.msra.mxu0 %v1139
      %1380 = vmatprep.subr.bf16.mxu0 %v1148
      %1381 = vmatpush1.bf16.msra.mxu0 %v1147
      %1382 = vmatprep.subr.bf16.mxu0 %v1156
      %1383 = vmatpush1.bf16.msra.mxu0 %v1155
      %1384 = vmatprep.subr.bf16.mxu0 %v1164
      %1385 = vmatpush1.bf16.msra.mxu0 %v1163
      %1386 = vmatprep.subr.bf16.mxu0 %v1172
      %1387 = vmatpush1.bf16.msra.mxu0 %v1171
      %1388 = vmatprep.subr.bf16.mxu0 %v1180
      %1389 = vmatpush1.bf16.msra.mxu0 %v1179
      %1390 = vmatprep.subr.bf16.mxu0 0
      %1391 = vmatpush1.bf16.msra.mxu0 0
      %1392 = vmatprep.subr.bf16.mxu0 0
      %1393 = vmatpush1.bf16.msra.mxu0 0
      %1394 = vmatprep.subr.bf16.mxu0 0
      %1395 = vmatpush1.bf16.msra.mxu0 0
      %1396 = vmatprep.subr.bf16.mxu0 0
      %1397 = vmatpush1.bf16.msra.mxu0 0
      %1398 = vmatprep.subr.bf16.mxu0 0
      %1399 = vmatpush1.bf16.msra.mxu0 0
      %1400 = vmatprep.subr.bf16.mxu0 0
      %1401 = vmatpush1.bf16.msra.mxu0 0
      %1402 = vmatprep.subr.bf16.mxu0 0
      %1403 = vmatpush1.bf16.msra.mxu0 0
      %1404 = vmatprep.subr.bf16.mxu0 0
      %1405 = vmatpush1.bf16.msra.mxu0 0
      %1406 = vmatprep.mubr.bf16.mxu0 0
      %1407 = vmatmul.mubr.bf16.gmra.mrb[0].mxu0 %v883
      %v1408 = vpop.f32.mrb[0].mxu0
      %v1409 = vadd.f32 %v912, %v1408
      %v1410 = vpop.f32.mrb[0].mxu0
      %v1411 = vadd.f32 %v916, %v1410
      %v1412 = vpop.f32.mrb[0].mxu0
      %v1413 = vadd.f32 %v912, %v1412
      %v1414 = vpop.f32.mrb[0].mxu0
      %v1415 = vadd.f32 %v916, %v1414
      %1416 = vdwg.mxu0
      %v1417 = vmul.f32 %v1280, 0.5
      %v1418 = vmul.f32 %v1282, 0.5
      %v1419 = vmul.f32 %v1323, 0.5
      %v1420 = vmul.f32 %v1325, 0.5
      %v1421 = vmul.f32 %v1284, 0.5
      %v1422 = vmul.f32 %v1286, 0.5
      %v1423 = vmul.f32 %v1327, 0.5
      %v1424 = vmul.f32 %v1329, 0.5
      %v1425 = vtanh.pop %v1417
      %v1426 = vtanh.pop %v1418
      %v1427 = vtanh.pop %v1419
      %v1428 = vtanh.pop %v1420
      %v1429 = vtanh.pop %v1421
      %v1430 = vtanh.pop %v1422
      %v1431 = vtanh.pop %v1423
      %v1432 = vtanh.pop %v1424
      %v1433 = vmul.f32 %v1425, 2.0
      %v1434 = vmul.f32 %v1426, 2.0
      %v1435 = vmul.f32 %v1427, 2.0
      %v1436 = vmul.f32 %v1428, 2.0
      %v1437 = vmul.f32 %v1429, 2.0
      %v1438 = vmul.f32 %v1430, 2.0
      %v1439 = vmul.f32 %v1431, 2.0
      %v1440 = vmul.f32 %v1432, 2.0
      %v1441 = vmul.f32 %v1433, 1.442695
      %v1442 = vpow.pop %v1441
      %v1443 = vmul.f32 %v1434, 1.442695
      %v1444 = vpow.pop %v1443
      %v1445 = vmul.f32 %v1435, 1.442695
      %v1446 = vpow.pop %v1445
      %v1447 = vmul.f32 %v1436, 1.442695
      %v1448 = vpow.pop %v1447
      %v1449 = vmul.f32 %v1437, 1.442695
      %v1450 = vpow.pop %v1449
      %v1451 = vmul.f32 %v1438, 1.442695
      %v1452 = vpow.pop %v1451
      %v1453 = vmul.f32 %v1439, 1.442695
      %v1454 = vpow.pop %v1453
      %v1455 = vmul.f32 %v1440, 1.442695
      %v1456 = vpow.pop %v1455
      %v1457 = vmul.f32 %v459, %v1442
      %v1458 = vmul.f32 %v460, %v1444
      %v1459 = vmul.f32 %v461, %v1446
      %v1460 = vmul.f32 %v462, %v1448
      %v1461 = vmul.f32 %v463, %v1450
      %v1462 = vmul.f32 %v464, %v1452
      %v1463 = vmul.f32 %v465, %v1454
      %v1464 = vmul.f32 %v466, %v1456
      %v1465 = vadd.f32 %v1457, %v1366
      %v1466 = vadd.f32 %v1458, %v1368
      %v1467 = vadd.f32 %v1459, %v1409
      %v1468 = vadd.f32 %v1460, %v1411
      %v1469 = vadd.f32 %v1461, %v1370
      %v1470 = vadd.f32 %v1462, %v1372
      %v1471 = vadd.f32 %v1463, %v1413
      %v1472 = vadd.f32 %v1464, %v1415
      %v1473 = vld [vmem:[#allocation4] sm:$0xff]
      %v1474 = vld [vmem:[#allocation4 + $0x8] sm:$0xff]
      %v1475 = vadd.f32 %v1433, %v1434
      %v1476 = vadd.f32 %v1475, %v1435
      %v1477 = vadd.f32 %v1476, %v1436
      %1478 = vadd.xlane.f32.xlu0 %v1477
      %v1479 = vpop.xlane.xlu0 %1478
      %v1480 = vadd.f32 %v1437, %v1438
      %v1481 = vadd.f32 %v1480, %v1439
      %v1482 = vadd.f32 %v1481, %v1440
      %1483 = vadd.xlane.f32.xlu0 %v1482
      %v1484 = vpop.xlane.xlu0 %1483
      %v1485 = vadd.f32 %v1473, %v1479
      %v1486 = vadd.f32 %v1474, %v1484
      %vm1487 = vcmask 7168
      %1488 = vst.msk [vmem:[#allocation4] sm:$0xff] %vm1487, %v1485
      %1489 = vst.msk [vmem:[#allocation4 + $0x8] sm:$0xff] %vm1487, %v1486
      %1490 = vst [vmem:[#allocation2] sm:$0xff] %v1465
      %1491 = vst [vmem:[#allocation2 + $0x8] sm:$0xff] %v1466
      %1492 = vst [vmem:[#allocation2 + $0x10] sm:$0xff] %v1467
      %1493 = vst [vmem:[#allocation2 + $0x18] sm:$0xff] %v1468
      %1494 = vst [vmem:[#allocation2 + $0x20] sm:$0xff] %v1469
      %1495 = vst [vmem:[#allocation2 + $0x28] sm:$0xff] %v1470
      %1496 = vst [vmem:[#allocation2 + $0x30] sm:$0xff] %v1471
      %1497 = vst [vmem:[#allocation2 + $0x38] sm:$0xff] %v1472
      %1498 = vst [vmem:[#allocation3] sm:$0xff] %v451
      %1499 = vst [vmem:[#allocation3 + $0x8] sm:$0xff] %v452
      %1500 = vst [vmem:[#allocation3 + $0x10] sm:$0xff] %v453
      %1501 = vst [vmem:[#allocation3 + $0x18] sm:$0xff] %v454
      %1502 = vst [vmem:[#allocation3 + $0x20] sm:$0xff] %v455
      %1503 = vst [vmem:[#allocation3 + $0x28] sm:$0xff] %v456
      %1504 = vst [vmem:[#allocation3 + $0x30] sm:$0xff] %v457
      %1505 = vst [vmem:[#allocation3 + $0x38] sm:$0xff] %v458
      %p1506 = scmp.eq.s32.totalorder %s25, 3
      // Predicated region
      $region53: #{ib_inn_forward.1} parent=47 // pred_check
        %p1507 = pneg %p1506
      $region54: #{ib_inn_forward.1} parent=47 // pred_check_branch
        %1509 = sbr.rel (%p1507) target = $region56
      $region55: #{ib_inn_forward.1} parent=47 // pred_region
        %v1510 = vld [vmem:[#allocation2] sm:$0xff]
        %v1511 = vld [vmem:[#allocation2 + $0x8] sm:$0xff]
        %v1512 = vld [vmem:[#allocation2 + $0x10] sm:$0xff]
        %v1513 = vld [vmem:[#allocation2 + $0x18] sm:$0xff]
        %v1514 = vld [vmem:[#allocation2 + $0x20] sm:$0xff]
        %v1515 = vld [vmem:[#allocation2 + $0x28] sm:$0xff]
        %v1516 = vld [vmem:[#allocation2 + $0x30] sm:$0xff]
        %v1517 = vld [vmem:[#allocation2 + $0x38] sm:$0xff]
        %v1518 = vld [vmem:[#allocation3] sm:$0xff]
        %v1519 = vld [vmem:[#allocation3 + $0x8] sm:$0xff]
        %v1520 = vld [vmem:[#allocation3 + $0x10] sm:$0xff]
        %v1521 = vld [vmem:[#allocation3 + $0x18] sm:$0xff]
        %v1522 = vld [vmem:[#allocation3 + $0x20] sm:$0xff]
        %v1523 = vld [vmem:[#allocation3 + $0x28] sm:$0xff]
        %v1524 = vld [vmem:[#allocation3 + $0x30] sm:$0xff]
        %v1525 = vld [vmem:[#allocation3 + $0x38] sm:$0xff]
        %1526 = vst [vmem:[%s403] sm:$0xff] %v1510
        %1527 = vst [vmem:[%s403 + $0x8] sm:$0xff] %v1511
        %1528 = vst [vmem:[%s403 + $0x10] sm:$0xff] %v1512
        %1529 = vst [vmem:[%s403 + $0x18] sm:$0xff] %v1513
        %1530 = vst [vmem:[%s403 + $0x40] sm:$0xff] %v1514
        %1531 = vst [vmem:[%s403 + $0x48] sm:$0xff] %v1515
        %1532 = vst [vmem:[%s403 + $0x50] sm:$0xff] %v1516
        %1533 = vst [vmem:[%s403 + $0x58] sm:$0xff] %v1517
        %1534 = vst [vmem:[%s403 + $0x20] sm:$0xff] %v1518
        %1535 = vst [vmem:[%s403 + $0x28] sm:$0xff] %v1519
        %1536 = vst [vmem:[%s403 + $0x30] sm:$0xff] %v1520
        %1537 = vst [vmem:[%s403 + $0x38] sm:$0xff] %v1521
        %1538 = vst [vmem:[%s403 + $0x60] sm:$0xff] %v1522
        %1539 = vst [vmem:[%s403 + $0x68] sm:$0xff] %v1523
        %1540 = vst [vmem:[%s403 + $0x70] sm:$0xff] %v1524
        %1541 = vst [vmem:[%s403 + $0x78] sm:$0xff] %v1525
        %v1542 = vmul.f32 %v1510, %v1510
        %v1543 = vmul.f32 %v1511, %v1511
        %v1544 = vmul.f32 %v1512, %v1512
        %v1545 = vmul.f32 %v1513, %v1513
        %v1546 = vmul.f32 %v1514, %v1514
        %v1547 = vmul.f32 %v1515, %v1515
        %v1548 = vmul.f32 %v1516, %v1516
        %v1549 = vmul.f32 %v1517, %v1517
        %v1550 = vadd.f32 %v1542, %v1543
        %v1551 = vadd.f32 %v1550, %v1544
        %v1552 = vadd.f32 %v1551, %v1545
        %1553 = vadd.xlane.f32.xlu0 %v1552
        %v1554 = vpop.xlane.xlu0 %1553
        %v1555 = vadd.f32 %v1546, %v1547
        %v1556 = vadd.f32 %v1555, %v1548
        %v1557 = vadd.f32 %v1556, %v1549
        %1558 = vadd.xlane.f32.xlu0 %v1557
        %v1559 = vpop.xlane.xlu0 %1558
        %v1560 = vmul.f32 %v1518, %v1518
        %v1561 = vmul.f32 %v1519, %v1519
        %v1562 = vmul.f32 %v1520, %v1520
        %v1563 = vmul.f32 %v1521, %v1521
        %v1564 = vmul.f32 %v1522, %v1522
        %v1565 = vmul.f32 %v1523, %v1523
        %v1566 = vmul.f32 %v1524, %v1524
        %v1567 = vmul.f32 %v1525, %v1525
        %v1568 = vadd.f32 %v1560, %v1561
        %v1569 = vadd.f32 %v1568, %v1562
        %v1570 = vadd.f32 %v1569, %v1563
        %1571 = vadd.xlane.f32.xlu0 %v1570
        %v1572 = vpop.xlane.xlu0 %1571
        %v1573 = vadd.f32 %v1564, %v1565
        %v1574 = vadd.f32 %v1573, %v1566
        %v1575 = vadd.f32 %v1574, %v1567
        %1576 = vadd.xlane.f32.xlu0 %v1575
        %v1577 = vpop.xlane.xlu0 %1576
        %v1578 = vadd.f32 %v1554, %v1572
        %v1579 = vadd.f32 %v1559, %v1577
        %v1580 = vld [vmem:[%s5] sm:$0xf]
        %v1581 = vld [vmem:[%s5 + $0x4] sm:$0xf]
        %v1582 = vld [vmem:[%s5 + $0x8] sm:$0xf]
        %v1583 = vld [vmem:[%s5 + $0xc] sm:$0xf]
        %v1584 = vld [vmem:[%s5 + $0x10] sm:$0xf]
        %v1585 = vld [vmem:[%s5 + $0x14] sm:$0xf]
        %v1586 = vld [vmem:[%s5 + $0x18] sm:$0xf]
        %v1587 = vld [vmem:[%s5 + $0x1c] sm:$0xf]
        %v1588 = vld [vmem:[%s5 + $0x20] sm:$0xf]
        %v1589 = vld [vmem:[%s5 + $0x24] sm:$0xf]
        %v1590 = vld [vmem:[%s5 + $0x28] sm:$0xf]
        %v1591 = vld [vmem:[%s5 + $0x2c] sm:$0xf]
        %v1592 = vld [vmem:[%s5 + $0x30] sm:$0xf]
        %v1593 = vld [vmem:[%s5 + $0x34] sm:$0xf]
        %v1594 = vld [vmem:[%s5 + $0x38] sm:$0xf]
        %v1595 = vld [vmem:[%s5 + $0x3c] sm:$0xf]
        %v1596 = vld [vmem:[%s5 + $0x40] sm:$0xf]
        %v1597 = vld [vmem:[%s5 + $0x44] sm:$0xf]
        %v1598 = vld [vmem:[%s5 + $0x48] sm:$0xf]
        %v1599 = vld [vmem:[%s5 + $0x4c] sm:$0xf]
        %v1600 = vld [vmem:[%s5 + $0x50] sm:$0xf]
        %v1601 = vld [vmem:[%s5 + $0x54] sm:$0xf]
        %v1602 = vld [vmem:[%s5 + $0x58] sm:$0xf]
        %v1603 = vld [vmem:[%s5 + $0x5c] sm:$0xf]
        %v1604 = vld [vmem:[%s5 + $0x60] sm:$0xf]
        %v1605 = vld [vmem:[%s5 + $0x64] sm:$0xf]
        %v1606 = vld [vmem:[%s5 + $0x68] sm:$0xf]
        %v1607 = vld [vmem:[%s5 + $0x6c] sm:$0xf]
        %v1608 = vld [vmem:[%s5 + $0x70] sm:$0xf]
        %v1609 = vld [vmem:[%s5 + $0x74] sm:$0xf]
        %v1610 = vld [vmem:[%s5 + $0x78] sm:$0xf]
        %v1611 = vld [vmem:[%s5 + $0x7c] sm:$0xf]
        %v1612 = vld [vmem:[%s5 + $0x80] sm:$0xf]
        %v1613 = vld [vmem:[%s5 + $0x84] sm:$0xf]
        %v1614 = vld [vmem:[%s5 + $0x88] sm:$0xf]
        %v1615 = vld [vmem:[%s5 + $0x8c] sm:$0xf]
        %v1616 = vld [vmem:[%s5 + $0x90] sm:$0xf]
        %v1617 = vld [vmem:[%s5 + $0x94] sm:$0xf]
        %v1618 = vld [vmem:[%s5 + $0x98] sm:$0xf]
        %v1619 = vld [vmem:[%s5 + $0x9c] sm:$0xf]
        %v1620 = vld [vmem:[%s5 + $0xa0] sm:$0xf]
        %v1621 = vld [vmem:[%s5 + $0xa4] sm:$0xf]
        %v1622 = vld [vmem:[%s5 + $0xa8] sm:$0xf]
        %v1623 = vld [vmem:[%s5 + $0xac] sm:$0xf]
        %v1624 = vld [vmem:[%s5 + $0xb0] sm:$0xf]
        %v1625 = vld [vmem:[%s5 + $0xb4] sm:$0xf]
        %v1626 = vld [vmem:[%s5 + $0xb8] sm:$0xf]
        %v1627 = vld [vmem:[%s5 + $0xbc] sm:$0xf]
        %v1628 = vld [vmem:[%s5 + $0xc0] sm:$0xf]
        %v1629 = vld [vmem:[%s5 + $0xc4] sm:$0xf]
        %v1630 = vld [vmem:[%s5 + $0xc8] sm:$0xf]
        %v1631 = vld [vmem:[%s5 + $0xcc] sm:$0xf]
        %v1632 = vld [vmem:[%s5 + $0xd0] sm:$0xf]
        %v1633 = vld [vmem:[%s5 + $0xd4] sm:$0xf]
        %v1634 = vld [vmem:[%s5 + $0xd8] sm:$0xf]
        %v1635 = vld [vmem:[%s5 + $0xdc] sm:$0xf]
        %v1636 = vld [vmem:[%s5 + $0xe0] sm:$0xf]
        %v1637 = vld [vmem:[%s5 + $0xe4] sm:$0xf]
        %v1638 = vld [vmem:[%s5 + $0xe8] sm:$0xf]
        %v1639 = vld [vmem:[%s5 + $0xec] sm:$0xf]
        %v1640 = vld [vmem:[%s5 + $0xf0] sm:$0xf]
        %v1641 = vld [vmem:[%s5 + $0xf4] sm:$0xf]
        %v1642 = vld [vmem:[%s5 + $0xf8] sm:$0xf]
        %v1643 = vld [vmem:[%s5 + $0xfc] sm:$0xf]
        %v1644 = vld [vmem:[%s5 + $0x100] sm:$0xf]
        %v1645 = vld [vmem:[%s5 + $0x104] sm:$0xf]
        %v1646 = vld [vmem:[%s5 + $0x108] sm:$0xf]
        %v1647 = vld [vmem:[%s5 + $0x10c] sm:$0xf]
        %v1648 = vld [vmem:[%s5 + $0x110] sm:$0xf]
        %v1649 = vld [vmem:[%s5 + $0x114] sm:$0xf]
        %v1650 = vld [vmem:[%s5 + $0x118] sm:$0xf]
        %v1651 = vld [vmem:[%s5 + $0x11c] sm:$0xf]
        %v1652 = vld [vmem:[%s5 + $0x120] sm:$0xf]
        %v1653 = vld [vmem:[%s5 + $0x124] sm:$0xf]
        %v1654 = vld [vmem:[%s5 + $0x128] sm:$0xf]
        %v1655 = vld [vmem:[%s5 + $0x12c] sm:$0xf]
        %v1656 = vld [vmem:[%s5 + $0x130] sm:$0xf]
        %v1657 = vld [vmem:[%s5 + $0x134] sm:$0xf]
        %v1658 = vld [vmem:[%s5 + $0x138] sm:$0xf]
        %v1659 = vld [vmem:[%s5 + $0x13c] sm:$0xf]
        %v1660 = vld [vmem:[%s5 + $0x140] sm:$0xf]
        %v1661 = vld [vmem:[%s5 + $0x144] sm:$0xf]
        %v1662 = vld [vmem:[%s5 + $0x148] sm:$0xf]
        %v1663 = vld [vmem:[%s5 + $0x14c] sm:$0xf]
        %v1664 = vld [vmem:[%s5 + $0x150] sm:$0xf]
        %v1665 = vld [vmem:[%s5 + $0x154] sm:$0xf]
        %v1666 = vld [vmem:[%s5 + $0x158] sm:$0xf]
        %v1667 = vld [vmem:[%s5 + $0x15c] sm:$0xf]
        %v1668 = vld [vmem:[%s5 + $0x160] sm:$0xf]
        %v1669 = vld [vmem:[%s5 + $0x164] sm:$0xf]
        %v1670 = vld [vmem:[%s5 + $0x168] sm:$0xf]
        %v1671 = vld [vmem:[%s5 + $0x16c] sm:$0xf]
        %v1672 = vld [vmem:[%s5 + $0x170] sm:$0xf]
        %v1673 = vld [vmem:[%s5 + $0x174] sm:$0xf]
        %v1674 = vld [vmem:[%s5 + $0x178] sm:$0xf]
        %v1675 = vld [vmem:[%s5 + $0x17c] sm:$0xf]
        %v1676 = vld [vmem:[%s5 + $0x180] sm:$0xf]
        %v1677 = vld [vmem:[%s5 + $0x184] sm:$0xf]
        %v1678 = vld [vmem:[%s5 + $0x188] sm:$0xf]
        %v1679 = vld [vmem:[%s5 + $0x18c] sm:$0xf]
        %v1680 = vld [vmem:[%s5 + $0x190] sm:$0xf]
        %v1681 = vld [vmem:[%s5 + $0x194] sm:$0xf]
        %v1682 = vld [vmem:[%s5 + $0x198] sm:$0xf]
        %v1683 = vld [vmem:[%s5 + $0x19c] sm:$0xf]
        %v1684 = vld [vmem:[%s5 + $0x1a0] sm:$0xf]
        %v1685 = vld [vmem:[%s5 + $0x1a4] sm:$0xf]
        %v1686 = vld [vmem:[%s5 + $0x1a8] sm:$0xf]
        %v1687 = vld [vmem:[%s5 + $0x1ac] sm:$0xf]
        %v1688 = vld [vmem:[%s5 + $0x1b0] sm:$0xf]
        %v1689 = vld [vmem:[%s5 + $0x1b4] sm:$0xf]
        %v1690 = vld [vmem:[%s5 + $0x1b8] sm:$0xf]
        %v1691 = vld [vmem:[%s5 + $0x1bc] sm:$0xf]
        %v1692 = vld [vmem:[%s5 + $0x1c0] sm:$0xf]
        %v1693 = vld [vmem:[%s5 + $0x1c4] sm:$0xf]
        %v1694 = vld [vmem:[%s5 + $0x1c8] sm:$0xf]
        %v1695 = vld [vmem:[%s5 + $0x1cc] sm:$0xf]
        %v1696 = vld [vmem:[%s5 + $0x1d0] sm:$0xf]
        %v1697 = vld [vmem:[%s5 + $0x1d4] sm:$0xf]
        %v1698 = vld [vmem:[%s5 + $0x1d8] sm:$0xf]
        %v1699 = vld [vmem:[%s5 + $0x1dc] sm:$0xf]
        %v1700 = vld [vmem:[%s5 + $0x1e0] sm:$0xf]
        %v1701 = vld [vmem:[%s5 + $0x1e4] sm:$0xf]
        %v1702 = vld [vmem:[%s5 + $0x1e8] sm:$0xf]
        %v1703 = vld [vmem:[%s5 + $0x1ec] sm:$0xf]
        %v1704 = vld [vmem:[%s5 + $0x1f0] sm:$0xf]
        %v1705 = vld [vmem:[%s5 + $0x1f4] sm:$0xf]
        %v1706 = vld [vmem:[%s5 + $0x1f8] sm:$0xf]
        %v1707 = vld [vmem:[%s5 + $0x1fc] sm:$0xf]
        %v1708 = vpack.c.bf16 %v1514, %v1510
        %v1709 = vpack.c.bf16 %v1515, %v1511
        %v1710 = vpack.c.bf16 %v1516, %v1512
        %v1711 = vpack.c.bf16 %v1517, %v1513
        %v1712 = vpack.c.bf16 %v1522, %v1518
        %v1713 = vpack.c.bf16 %v1523, %v1519
        %v1714 = vpack.c.bf16 %v1524, %v1520
        %v1715 = vpack.c.bf16 %v1525, %v1521
        %v1780 = vunpack.c.l.b16 %v1644
        %v1781 = vunpack.c.l.b16 %v1645
        %v1782 = vunpack.c.l.b16 %v1646
        %v1783 = vunpack.c.l.b16 %v1647
        %v1784 = vunpack.c.l.b16 %v1648
        %v1785 = vunpack.c.l.b16 %v1649
        %v1786 = vunpack.c.l.b16 %v1650
        %v1787 = vunpack.c.l.b16 %v1651
        %v1788 = vunpack.c.l.b16 %v1652
        %v1789 = vunpack.c.l.b16 %v1653
        %v1790 = vunpack.c.l.b16 %v1654
        %v1791 = vunpack.c.l.b16 %v1655
        %v1792 = vunpack.c.l.b16 %v1656
        %v1793 = vunpack.c.l.b16 %v1657
        %v1794 = vunpack.c.l.b16 %v1658
        %v1795 = vunpack.c.l.b16 %v1659
        %v1796 = vunpack.c.l.b16 %v1660
        %v1797 = vunpack.c.l.b16 %v1661
        %v1798 = vunpack.c.l.b16 %v1662
        %v1799 = vunpack.c.l.b16 %v1663
        %v1800 = vunpack.c.l.b16 %v1664
        %v1801 = vunpack.c.l.b16 %v1665
        %v1802 = vunpack.c.l.b16 %v1666
        %v1803 = vunpack.c.l.b16 %v1667
        %v1804 = vunpack.c.l.b16 %v1668
        %v1805 = vunpack.c.l.b16 %v1669
        %v1806 = vunpack.c.l.b16 %v1670
        %v1807 = vunpack.c.l.b16 %v1671
        %v1808 = vunpack.c.l.b16 %v1672
        %v1809 = vunpack.c.l.b16 %v1673
        %v1810 = vunpack.c.l.b16 %v1674
        %v1811 = vunpack.c.l.b16 %v1675
        %v1812 = vunpack.c.l.b16 %v1676
        %v1813 = vunpack.c.l.b16 %v1677
        %v1814 = vunpack.c.l.b16 %v1678
        %v1815 = vunpack.c.l.b16 %v1679
        %v1816 = vunpack.c.l.b16 %v1680
        %v1817 = vunpack.c.l.b16 %v1681
        %v1818 = vunpack.c.l.b16 %v1682
        %v1819 = vunpack.c.l.b16 %v1683
        %v1820 = vunpack.c.l.b16 %v1684
        %v1821 = vunpack.c.l.b16 %v1685
        %v1822 = vunpack.c.l.b16 %v1686
        %v1823 = vunpack.c.l.b16 %v1687
        %v1824 = vunpack.c.l.b16 %v1688
        %v1825 = vunpack.c.l.b16 %v1689
        %v1826 = vunpack.c.l.b16 %v1690
        %v1827 = vunpack.c.l.b16 %v1691
        %v1828 = vunpack.c.l.b16 %v1692
        %v1829 = vunpack.c.l.b16 %v1693
        %v1830 = vunpack.c.l.b16 %v1694
        %v1831 = vunpack.c.l.b16 %v1695
        %v1832 = vunpack.c.l.b16 %v1696
        %v1833 = vunpack.c.l.b16 %v1697
        %v1834 = vunpack.c.l.b16 %v1698
        %v1835 = vunpack.c.l.b16 %v1699
        %v1836 = vunpack.c.l.b16 %v1700
        %v1837 = vunpack.c.l.b16 %v1701
        %v1838 = vunpack.c.l.b16 %v1702
        %v1839 = vunpack.c.l.b16 %v1703
        %v1840 = vunpack.c.l.b16 %v1704
        %v1841 = vunpack.c.l.b16 %v1705
        %v1842 = vunpack.c.l.b16 %v1706
        %v1843 = vunpack.c.l.b16 %v1707
        %v1844 = vpack.c.b16 %v1781, %v1780
        %v1845 = vpack.c.b16 %v1783, %v1782
        %v1846 = vpack.c.b16 %v1785, %v1784
        %v1847 = vpack.c.b16 %v1787, %v1786
        %v1848 = vpack.c.b16 %v1789, %v1788
        %v1849 = vpack.c.b16 %v1791, %v1790
        %v1850 = vpack.c.b16 %v1793, %v1792
        %v1851 = vpack.c.b16 %v1795, %v1794
        %v1852 = vpack.c.b16 %v1797, %v1796
        %v1853 = vpack.c.b16 %v1799, %v1798
        %v1854 = vpack.c.b16 %v1801, %v1800
        %v1855 = vpack.c.b16 %v1803, %v1802
        %v1856 = vpack.c.b16 %v1805, %v1804
        %v1857 = vpack.c.b16 %v1807, %v1806
        %v1858 = vpack.c.b16 %v1809, %v1808
        %v1859 = vpack.c.b16 %v1811, %v1810
        %v1860 = vpack.c.b16 %v1813, %v1812
        %v1861 = vpack.c.b16 %v1815, %v1814
        %v1862 = vpack.c.b16 %v1817, %v1816
        %v1863 = vpack.c.b16 %v1819, %v1818
        %v1864 = vpack.c.b16 %v1821, %v1820
        %v1865 = vpack.c.b16 %v1823, %v1822
        %v1866 = vpack.c.b16 %v1825, %v1824
        %v1867 = vpack.c.b16 %v1827, %v1826
        %v1868 = vpack.c.b16 %v1829, %v1828
        %v1869 = vpack.c.b16 %v1831, %v1830
        %v1870 = vpack.c.b16 %v1833, %v1832
        %v1871 = vpack.c.b16 %v1835, %v1834
        %v1872 = vpack.c.b16 %v1837, %v1836
        %v1873 = vpack.c.b16 %v1839, %v1838
        %v1874 = vpack.c.b16 %v1841, %v1840
        %v1875 = vpack.c.b16 %v1843, %v1842
        %1908 = vmatprep.subr.bf16.mxu0 0
        %1909 = vmatpush1.bf16.msra.mxu0 %v1844
        %1910 = vmatprep.subr.bf16.mxu0 0
        %1911 = vmatpush1.bf16.msra.mxu0 %v1845
        %1912 = vmatprep.subr.bf16.mxu0 0
        %1913 = vmatpush1.bf16.msra.mxu0 %v1846
        %1914 = vmatprep.subr.bf16.mxu0 0
        %1915 = vmatpush1.bf16.msra.mxu0 %v1847
        %1916 = vmatprep.subr.bf16.mxu0 0
        %1917 = vmatpush1.bf16.msra.mxu0 %v1848
        %1918 = vmatprep.subr.bf16.mxu0 0
        %1919 = vmatpush1.bf16.msra.mxu0 %v1849
        %1920 = vmatprep.subr.bf16.mxu0 0
        %1921 = vmatpush1.bf16.msra.mxu0 %v1850
        %1922 = vmatprep.subr.bf16.mxu0 0
        %1923 = vmatpush1.bf16.msra.mxu0 %v1851
        %1924 = vmatprep.subr.bf16.mxu0 0
        %1925 = vmatpush1.bf16.msra.mxu0 %v1852
        %1926 = vmatprep.subr.bf16.mxu0 0
        %1927 = vmatpush1.bf16.msra.mxu0 %v1853
        %1928 = vmatprep.subr.bf16.mxu0 0
        %1929 = vmatpush1.bf16.msra.mxu0 %v1854
        %1930 = vmatprep.subr.bf16.mxu0 0
        %1931 = vmatpush1.bf16.msra.mxu0 %v1855
        %1932 = vmatprep.subr.bf16.mxu0 0
        %1933 = vmatpush1.bf16.msra.mxu0 %v1856
        %1934 = vmatprep.subr.bf16.mxu0 0
        %1935 = vmatpush1.bf16.msra.mxu0 %v1857
        %1936 = vmatprep.subr.bf16.mxu0 0
        %1937 = vmatpush1.bf16.msra.mxu0 %v1858
        %1938 = vmatprep.subr.bf16.mxu0 0
        %1939 = vmatpush1.bf16.msra.mxu0 %v1859
        %1940 = vmatprep.mubr.bf16.mxu0 %v1713
        %1941 = vmatmul.mubr.bf16.gmra.mrb[0].mxu0 %v1712
        %v1942 = vpop.f32.mrb[0].mxu0
        %v1943 = vadd.f32 0.0, %v1942
        %v1944 = vpop.f32.mrb[0].mxu0
        %v1945 = vpop.f32.mrb[0].mxu0
        %v1946 = vadd.f32 0.0, %v1945
        %v1947 = vpop.f32.mrb[0].mxu0
        %1948 = vdwg.mxu0
        %1949 = vmatprep.subr.bf16.mxu0 0
        %1950 = vmatpush1.bf16.msra.mxu0 %v1860
        %1951 = vmatprep.subr.bf16.mxu0 0
        %1952 = vmatpush1.bf16.msra.mxu0 %v1861
        %1953 = vmatprep.subr.bf16.mxu0 0
        %1954 = vmatpush1.bf16.msra.mxu0 %v1862
        %1955 = vmatprep.subr.bf16.mxu0 0
        %1956 = vmatpush1.bf16.msra.mxu0 %v1863
        %1957 = vmatprep.subr.bf16.mxu0 0
        %1958 = vmatpush1.bf16.msra.mxu0 %v1864
        %1959 = vmatprep.subr.bf16.mxu0 0
        %1960 = vmatpush1.bf16.msra.mxu0 %v1865
        %1961 = vmatprep.subr.bf16.mxu0 0
        %1962 = vmatpush1.bf16.msra.mxu0 %v1866
        %1963 = vmatprep.subr.bf16.mxu0 0
        %1964 = vmatpush1.bf16.msra.mxu0 %v1867
        %1965 = vmatprep.subr.bf16.mxu0 0
        %1966 = vmatpush1.bf16.msra.mxu0 %v1868
        %1967 = vmatprep.subr.bf16.mxu0 0
        %1968 = vmatpush1.bf16.msra.mxu0 %v1869
        %1969 = vmatprep.subr.bf16.mxu0 0
        %1970 = vmatpush1.bf16.msra.mxu0 %v1870
        %1971 = vmatprep.subr.bf16.mxu0 0
        %1972 = vmatpush1.bf16.msra.mxu0 %v1871
        %1973 = vmatprep.subr.bf16.mxu0 0
        %1974 = vmatpush1.bf16.msra.mxu0 %v1872
        %1975 = vmatprep.subr.bf16.mxu0 0
        %1976 = vmatpush1.bf16.msra.mxu0 %v1873
        %1977 = vmatprep.subr.bf16.mxu0 0
        %1978 = vmatpush1.bf16.msra.mxu0 %v1874
        %1979 = vmatprep.subr.bf16.mxu0 0
        %1980 = vmatpush1.bf16.msra.mxu0 %v1875
        %1981 = vmatprep.mubr.bf16.mxu0 %v1715
        %1982 = vmatmul.mubr.bf16.gmra.mrb[0].mxu0 %v1714
        %v1983 = vpop.f32.mrb[0].mxu0
        %v1984 = vadd.f32 %v1943, %v1983
        %v1985 = vpop.f32.mrb[0].mxu0
        %v1986 = vpop.f32.mrb[0].mxu0
        %v1987 = vadd.f32 %v1946, %v1986
        %v1988 = vpop.f32.mrb[0].mxu0
        %1989 = vdwg.mxu0
        %v2054 = vunpack.c.l.b16 %v1580
        %v2055 = vunpack.c.l.b16 %v1581
        %v2056 = vunpack.c.l.b16 %v1582
        %v2057 = vunpack.c.l.b16 %v1583
        %v2058 = vunpack.c.l.b16 %v1584
        %v2059 = vunpack.c.l.b16 %v1585
        %v2060 = vunpack.c.l.b16 %v1586
        %v2061 = vunpack.c.l.b16 %v1587
        %v2062 = vunpack.c.l.b16 %v1588
        %v2063 = vunpack.c.l.b16 %v1589
        %v2064 = vunpack.c.l.b16 %v1590
        %v2065 = vunpack.c.l.b16 %v1591
        %v2066 = vunpack.c.l.b16 %v1592
        %v2067 = vunpack.c.l.b16 %v1593
        %v2068 = vunpack.c.l.b16 %v1594
        %v2069 = vunpack.c.l.b16 %v1595
        %v2070 = vunpack.c.l.b16 %v1596
        %v2071 = vunpack.c.l.b16 %v1597
        %v2072 = vunpack.c.l.b16 %v1598
        %v2073 = vunpack.c.l.b16 %v1599
        %v2074 = vunpack.c.l.b16 %v1600
        %v2075 = vunpack.c.l.b16 %v1601
        %v2076 = vunpack.c.l.b16 %v1602
        %v2077 = vunpack.c.l.b16 %v1603
        %v2078 = vunpack.c.l.b16 %v1604
        %v2079 = vunpack.c.l.b16 %v1605
        %v2080 = vunpack.c.l.b16 %v1606
        %v2081 = vunpack.c.l.b16 %v1607
        %v2082 = vunpack.c.l.b16 %v1608
        %v2083 = vunpack.c.l.b16 %v1609
        %v2084 = vunpack.c.l.b16 %v1610
        %v2085 = vunpack.c.l.b16 %v1611
        %v2086 = vunpack.c.l.b16 %v1612
        %v2087 = vunpack.c.l.b16 %v1613
        %v2088 = vunpack.c.l.b16 %v1614
        %v2089 = vunpack.c.l.b16 %v1615
        %v2090 = vunpack.c.l.b16 %v1616
        %v2091 = vunpack.c.l.b16 %v1617
        %v2092 = vunpack.c.l.b16 %v1618
        %v2093 = vunpack.c.l.b16 %v1619
        %v2094 = vunpack.c.l.b16 %v1620
        %v2095 = vunpack.c.l.b16 %v1621
        %v2096 = vunpack.c.l.b16 %v1622
        %v2097 = vunpack.c.l.b16 %v1623
        %v2098 = vunpack.c.l.b16 %v1624
        %v2099 = vunpack.c.l.b16 %v1625
        %v2100 = vunpack.c.l.b16 %v1626
        %v2101 = vunpack.c.l.b16 %v1627
        %v2102 = vunpack.c.l.b16 %v1628
        %v2103 = vunpack.c.l.b16 %v1629
        %v2104 = vunpack.c.l.b16 %v1630
        %v2105 = vunpack.c.l.b16 %v1631
        %v2106 = vunpack.c.l.b16 %v1632
        %v2107 = vunpack.c.l.b16 %v1633
        %v2108 = vunpack.c.l.b16 %v1634
        %v2109 = vunpack.c.l.b16 %v1635
        %v2110 = vunpack.c.l.b16 %v1636
        %v2111 = vunpack.c.l.b16 %v1637
        %v2112 = vunpack.c.l.b16 %v1638
        %v2113 = vunpack.c.l.b16 %v1639
        %v2114 = vunpack.c.l.b16 %v1640
        %v2115 = vunpack.c.l.b16 %v1641
        %v2116 = vunpack.c.l.b16 %v1642
        %v2117 = vunpack.c.l.b16 %v1643
        %v2118 = vpack.c.b16 %v2055, %v2054
        %v2119 = vpack.c.b16 %v2057, %v2056
        %v2120 = vpack.c.b16 %v2059, %v2058
        %v2121 = vpack.c.b16 %v2061, %v2060
        %v2122 = vpack.c.b16 %v2063, %v2062
        %v2123 = vpack.c.b16 %v2065, %v2064
        %v2124 = vpack.c.b16 %v2067, %v2066
        %v2125 = vpack.c.b16 %v2069, %v2068
        %v2126 = vpack.c.b16 %v2071, %v2070
        %v2127 = vpack.c.b16 %v2073, %v2072
        %v2128 = vpack.c.b16 %v2075, %v2074
        %v2129 = vpack.c.b16 %v2077, %v2076
        %v2130 = vpack.c.b16 %v2079, %v2078
        %v2131 = vpack.c.b16 %v2081, %v2080
        %v2132 = vpack.c.b16 %v2083, %v2082
        %v2133 = vpack.c.b16 %v2085, %v2084
        %v2134 = vpack.c.b16 %v2087, %v2086
        %v2135 = vpack.c.b16 %v2089, %v2088
        %v2136 = vpack.c.b16 %v2091, %v2090
        %v2137 = vpack.c.b16 %v2093, %v2092
        %v2138 = vpack.c.b16 %v2095, %v2094
        %v2139 = vpack.c.b16 %v2097, %v2096
        %v2140 = vpack.c.b16 %v2099, %v2098
        %v2141 = vpack.c.b16 %v2101, %v2100
        %v2142 = vpack.c.b16 %v2103, %v2102
        %v2143 = vpack.c.b16 %v2105, %v2104
        %v2144 = vpack.c.b16 %v2107, %v2106
        %v2145 = vpack.c.b16 %v2109, %v2108
        %v2146 = vpack.c.b16 %v2111, %v2110
        %v2147 = vpack.c.b16 %v2113, %v2112
        %v2148 = vpack.c.b16 %v2115, %v2114
        %v2149 = vpack.c.b16 %v2117, %v2116
        %2182 = vmatprep.subr.bf16.mxu0 0
        %2183 = vmatpush1.bf16.msra.mxu0 %v2118
        %2184 = vmatprep.subr.bf16.mxu0 0
        %2185 = vmatpush1.bf16.msra.mxu0 %v2119
        %2186 = vmatprep.subr.bf16.mxu0 0
        %2187 = vmatpush1.bf16.msra.mxu0 %v2120
        %2188 = vmatprep.subr.bf16.mxu0 0
        %2189 = vmatpush1.bf16.msra.mxu0 %v2121
        %2190 = vmatprep.subr.bf16.mxu0 0
        %2191 = vmatpush1.bf16.msra.mxu0 %v2122
        %2192 = vmatprep.subr.bf16.mxu0 0
        %2193 = vmatpush1.bf16.msra.mxu0 %v2123
        %2194 = vmatprep.subr.bf16.mxu0 0
        %2195 = vmatpush1.bf16.msra.mxu0 %v2124
        %2196 = vmatprep.subr.bf16.mxu0 0
        %2197 = vmatpush1.bf16.msra.mxu0 %v2125
        %2198 = vmatprep.subr.bf16.mxu0 0
        %2199 = vmatpush1.bf16.msra.mxu0 %v2126
        %2200 = vmatprep.subr.bf16.mxu0 0
        %2201 = vmatpush1.bf16.msra.mxu0 %v2127
        %2202 = vmatprep.subr.bf16.mxu0 0
        %2203 = vmatpush1.bf16.msra.mxu0 %v2128
        %2204 = vmatprep.subr.bf16.mxu0 0
        %2205 = vmatpush1.bf16.msra.mxu0 %v2129
        %2206 = vmatprep.subr.bf16.mxu0 0
        %2207 = vmatpush1.bf16.msra.mxu0 %v2130
        %2208 = vmatprep.subr.bf16.mxu0 0
        %2209 = vmatpush1.bf16.msra.mxu0 %v2131
        %2210 = vmatprep.subr.bf16.mxu0 0
        %2211 = vmatpush1.bf16.msra.mxu0 %v2132
        %2212 = vmatprep.subr.bf16.mxu0 0
        %2213 = vmatpush1.bf16.msra.mxu0 %v2133
        %2214 = vmatprep.mubr.bf16.mxu0 %v1709
        %2215 = vmatmul.mubr.bf16.gmra.mrb[0].mxu0 %v1708
        %v2216 = vpop.f32.mrb[0].mxu0
        %v2217 = vadd.f32 %v1984, %v2216
        %v2218 = vpop.f32.mrb[0].mxu0
        %v2219 = vpop.f32.mrb[0].mxu0
        %v2220 = vadd.f32 %v1987, %v2219
        %v2221 = vpop.f32.mrb[0].mxu0
        %2222 = vdwg.mxu0
        %2223 = vmatprep.subr.bf16.mxu0 0
        %2224 = vmatpush1.bf16.msra.mxu0 %v2134
        %2225 = vmatprep.subr.bf16.mxu0 0
        %2226 = vmatpush1.bf16.msra.mxu0 %v2135
        %2227 = vmatprep.subr.bf16.mxu0 0
        %2228 = vmatpush1.bf16.msra.mxu0 %v2136
        %2229 = vmatprep.subr.bf16.mxu0 0
        %2230 = vmatpush1.bf16.msra.mxu0 %v2137
        %2231 = vmatprep.subr.bf16.mxu0 0
        %2232 = vmatpush1.bf16.msra.mxu0 %v2138
        %2233 = vmatprep.subr.bf16.mxu0 0
        %2234 = vmatpush1.bf16.msra.mxu0 %v2139
        %2235 = vmatprep.subr.bf16.mxu0 0
        %2236 = vmatpush1.bf16.msra.mxu0 %v2140
        %2237 = vmatprep.subr.bf16.mxu0 0
        %2238 = vmatpush1.bf16.msra.mxu0 %v2141
        %2239 = vmatprep.subr.bf16.mxu0 0
        %2240 = vmatpush1.bf16.msra.mxu0 %v2142
        %2241 = vmatprep.subr.bf16.mxu0 0
        %2242 = vmatpush1.bf16.msra.mxu0 %v2143
        %2243 = vmatprep.subr.bf16.mxu0 0
        %2244 = vmatpush1.bf16.msra.mxu0 %v2144
        %2245 = vmatprep.subr.bf16.mxu0 0
        %2246 = vmatpush1.bf16.msra.mxu0 %v2145
        %2247 = vmatprep.subr.bf16.mxu0 0
        %2248 = vmatpush1.bf16.msra.mxu0 %v2146
        %2249 = vmatprep.subr.bf16.mxu0 0
        %2250 = vmatpush1.bf16.msra.mxu0 %v2147
        %2251 = vmatprep.subr.bf16.mxu0 0
        %2252 = vmatpush1.bf16.msra.mxu0 %v2148
        %2253 = vmatprep.subr.bf16.mxu0 0
        %2254 = vmatpush1.bf16.msra.mxu0 %v2149
        %2255 = vmatprep.mubr.bf16.mxu0 %v1711
        %2256 = vmatmul.mubr.bf16.gmra.mrb[0].mxu0 %v1710
        %v2257 = vpop.f32.mrb[0].mxu0
        %v2258 = vadd.f32 %v2217, %v2257
        %v2259 = vpop.f32.mrb[0].mxu0
        %v2260 = vpop.f32.mrb[0].mxu0
        %v2261 = vadd.f32 %v2220, %v2260
        %v2262 = vpop.f32.mrb[0].mxu0
        %2263 = vdwg.mxu0
        %v2264 = vmul.f32 %v1578, 0.5
        %v2265 = vmul.f32 %v1579, 0.5
        %v2266 = vsub.f32 %v2258, %v2264
        %v2267 = vsub.f32 %v2261, %v2265
        %v2268 = vld [vmem:[%s6] sm:$0x1]
        %v2270 = vlaneseq
        %v2271 = vshrl.u32 %v2270, 7
        %v2272 = vsub.s32 0, %v2271
        %v2273 = vrot.slane %v2268, %v2272
        %v2275 = vadd.f32 %v2266, %v2273
        %v2276 = vadd.f32 %v2267, %v2273
        %v2277 = vlaneseq
        %v2278 = vand.u32 %v2277, 127
        %vm2279 = vcmp.eq.s32.totalorder %v2278, 127
        %v2280 = vld [vmem:[#allocation4] sm:$0xff]
        %v2281 = vld [vmem:[#allocation4 + $0x8] sm:$0xff]
        %2283 = vset.pattern.permute.xlu0 0
        %2284 = vperm.xlu0 %2283, %v2280
        %v2285 = vpop.permute.xlu0 %2284
        %2288 = vset.pattern.permute.xlu0 0
        %2289 = vperm.xlu0 %2288, %v2281
        %v2290 = vpop.permute.xlu0 %2289
        %v2292 = vsel %vm2279, %v2285, %v2275
        %v2293 = vsel %vm2279, %v2290, %v2276
        %2294 = vst [vmem:[%s409] sm:$0xff] %v2292
        %2295 = vst [vmem:[%s409 + $0x8] sm:$0xff] %v2293
      $region56: #{ib_inn_forward.1} parent=47 // pred_fallthru
        _
      %s2296 = smul.u32 2, %s24
      %p2297 = scmp.lt.s32.totalorder %s2296, 1
      %s2298 = scalar_select %p2297, %s2296, 1
      %s2299 = smul.addr %s2298, 8
      %s2300 = smul.addr %s2299, 8
      %s2301 = scalar_lea.vmem %s7, %s2300
      %s2302 = smul.u32 2, %s24
      %p2303 = scmp.lt.s32.totalorder %s2302, 1
      %s2304 = scalar_select %p2303, %s2302, 1
      %s2305 = smul.addr %s2304, 8
      %s2306 = scalar_lea.vmem %s8, %s2305
      // Predicated region
      $region57: #{ib_inn_forward.1} parent=47 // pred_check
        %p2307 = pneg %p222
      $region58: #{ib_inn_forward.1} parent=47 // pred_check_branch
        %2309 = sbr.rel (%p2307) target = $region60
      $region59: #{ib_inn_forward.1} parent=47 // pred_region
        %s2310 = smul.u32 2, %s24
      $region60: #{ib_inn_forward.1} parent=47 // pred_fallthru
        _
      // Predicated region
      $region61: #{ib_inn_forward.1} parent=47 // pred_check
        %p2311 = pneg %p248
      $region62: #{ib_inn_forward.1} parent=47 // pred_check_branch
        %2313 = sbr.rel (%p2311) target = $region64
      $region63: #{ib_inn_forward.1} parent=47 // pred_region
        %s2314 = smul.u32 2, %s24
      $region64: #{ib_inn_forward.1} parent=47 // pred_fallthru
        _
      // Predicated region
      $region65: #{ib_inn_forward.1} parent=47 // pred_check
        %p2315 = pneg %p222
      $region66: #{ib_inn_forward.1} parent=47 // pred_check_branch
        %2317 = sbr.rel (%p2315) target = $region68
      $region67: #{ib_inn_forward.1} parent=47 // pred_region
        %s2318 = smul.u32 2, %s24
        %p2319 = scmp.lt.s32.totalorder %s2318, 1
        %s2320 = scalar_select %p2319, %s2318, 1
        %s2321 = smul.addr %s2320, 8
        %s2322 = smul.addr %s2321, 8
        %s2323 = scalar_lea.vmem %s7, %s2322
      $region68: #{ib_inn_forward.1} parent=47 // pred_fallthru
        _
      // Predicated region
      $region69: #{ib_inn_forward.1} parent=47 // pred_check
        %p2324 = pneg %p248
      $region70: #{ib_inn_forward.1} parent=47 // pred_check_branch
        %2326 = sbr.rel (%p2324) target = $region72
      $region71: #{ib_inn_forward.1} parent=47 // pred_region
        %s2327 = smul.u32 2, %s24
        %p2328 = scmp.lt.s32.totalorder %s2327, 1
        %s2329 = scalar_select %p2328, %s2327, 1
        %s2330 = smul.addr %s2329, 8
        %s2331 = scalar_lea.vmem %s8, %s2330
      $region72: #{ib_inn_forward.1} parent=47 // pred_fallthru
        _
    $region48: #{ib_inn_forward.1} parent=5 // pred_fallthru
      _
    %p2332 = scmp.le.s32.totalorder 2, %s15
    // Predicated region
    $region73: #{ib_inn_forward.1} parent=5 // pred_check
      %p2333 = pneg %p2332
    $region74: #{ib_inn_forward.1} parent=5 // pred_check_branch
      %2335 = sbr.rel (%p2333) target = $region76
    $region75: #{ib_inn_forward.1} parent=5 // pred_region
      %s2336 = ssub.s32 %s15, 2
    $region76: #{ib_inn_forward.1} parent=5 // pred_fallthru
      _
  $region6: #{ib_inn_forward.1} parent=0 // loop_footer
    %s19 = sadd.s32 1, %s15
  $region7: #{ib_inn_forward.1} parent=0 // loop_footer_branch
    %14 = sbr.rel target = $region3
  $region8: #{ib_inn_forward.1} parent=0 // loop_exit
    _

</llo_original>
